<compile_context>
chip_gen: v5e
topology: v5e:2x2
jax: 0.10.0
libtpu: 0.0.40
codegen_flags: <defaults>
</compile_context>

<pallas_src>
import math
import jax
import jax.numpy as jnp
from jax import lax
from jax.experimental import pallas as pl
from jax.experimental.pallas import tpu as pltpu

# ---------------- model hyper-parameters (small synthetic config) -------------
B, T, H = 2, 8, 32            # batch, phoneme sequence length, encoder hidden
NUM_HEADS = 2
HEAD_DIM = H // NUM_HEADS
FFN = 64                      # transformer feed-forward width
NUM_LAYERS = 2                # encoder layers
VP_FILTER, VP_KERNEL = 32, 3  # VariancePredictor filter size / kernel size
VP_PAD = (VP_KERNEL - 1) // 2
N_PHONEME, N_ACCENT, N_SPEAKER = 45, 10, 3
LN_EPS = 1e-5                 # torch.nn.LayerNorm default

# packed-vector row indices (encoder per-layer H-wide vectors)
_LN1G, _LN1B, _BO, _LN2G, _LN2B, _B2 = range(6)
# packed-vector row indices (VariancePredictor F-wide vectors)
_CB1, _VLN1G, _VLN1B, _CB2, _VLN2G, _VLN2B, _WL, _BL = range(8)


# ---------------- shared in-kernel helpers ------------------------------------
def _ln(x, g, b):
    mu = jnp.mean(x, axis=-1, keepdims=True)
    var = jnp.mean((x - mu) ** 2, axis=-1, keepdims=True)
    return (x - mu) * lax.rsqrt(var + LN_EPS) * g + b


def _full_spec(shape):
    nd = len(shape)
    return pl.BlockSpec(shape, lambda b, _nd=nd: (0,) * _nd)


# ---------------- fused Pallas kernel ------------------------------------------
def fused_kernel(x_ref, spk_ref,
                 enc_vec, enc_qkv, enc_qkv_b, enc_wo, enc_w1, enc_b1, enc_w2,
                 final_vec, vp_cw1, vp_cw2, vp_vec,
                 o_ref):
    """Encoder layers + after_norm + speaker add + both VariancePredictors,
    for one batch element (grid axis over B)."""
    x = x_ref[0]                                          # (T, H)
    scale = 1.0 / math.sqrt(HEAD_DIM)

    # ---- transformer encoder (pre-LN), statically unrolled over layers ----
    for l in range(NUM_LAYERS):
        # --- self attention ---
        h = _ln(x, enc_vec[l, _LN1G:_LN1G + 1, :], enc_vec[l, _LN1B:_LN1B + 1, :])
        qkv = jnp.dot(h, enc_qkv[l], preferred_element_type=jnp.float32) + enc_qkv_b[l]
        # TODO(synk): x_masks is all-ones when phoneme_lens is None, so the attention
        # mask is omitted; length-masked attention would need an extra mask input.
        attn = enc_vec[l, _BO:_BO + 1, :]                 # output-proj bias, (1, H)
        for hh in range(NUM_HEADS):
            q0 = hh * HEAD_DIM
            qh = qkv[:, q0:q0 + HEAD_DIM]
            kh = qkv[:, H + q0:H + q0 + HEAD_DIM]
            vh = qkv[:, 2 * H + q0:2 * H + q0 + HEAD_DIM]
            s = lax.dot_general(qh, kh, (((1,), (1,)), ((), ())),
                                preferred_element_type=jnp.float32) * scale
            s = s - jnp.max(s, axis=-1, keepdims=True)
            p = jnp.exp(s)
            p = p * pl.reciprocal(jnp.sum(p, axis=-1, keepdims=True), approx=True)
            ctx = jnp.dot(p, vh, preferred_element_type=jnp.float32)   # (T, HD)
            # concat(heads) @ Wo  ==  sum_h head_h @ Wo[head-h rows]  (no concatenate)
            attn = attn + jnp.dot(ctx, enc_wo[l, q0:q0 + HEAD_DIM, :],
                                  preferred_element_type=jnp.float32)
        x = x + attn
        # --- position-wise feed forward ---
        h2 = _ln(x, enc_vec[l, _LN2G:_LN2G + 1, :], enc_vec[l, _LN2B:_LN2B + 1, :])
        f = jnp.maximum(jnp.dot(h2, enc_w1[l], preferred_element_type=jnp.float32)
                        + enc_b1[l], 0.0)
        f = (jnp.dot(f, enc_w2[l], preferred_element_type=jnp.float32)
             + enc_vec[l, _B2:_B2 + 1, :])
        x = x + f

    # ---- encoder after_norm + speaker-embedding broadcast add ----
    hs = _ln(x, final_vec[0:1, :], final_vec[1:2, :]) + spk_ref[0]     # (T, H)

    # ---- variance predictors (0 = pitch, 1 = duration) ----
    row = lax.broadcasted_iota(jnp.int32, (T, 1), 0)

    def conv1d(v, w_ref, vpi, b):
        """Same-padded Conv1d as K per-tap matmuls; shifts via pltpu.roll + edge mask."""
        acc = b                                           # (1, Cout), broadcasts
        for kk in range(VP_KERNEL):
            shift = VP_PAD - kk
            if shift == 0:
                tap = v
            else:
                rolled = pltpu.roll(v, shift % T, axis=0)
                if shift > 0:
                    tap = jnp.where(row < shift, 0.0, rolled)
                else:
                    tap = jnp.where(row >= T + shift, 0.0, rolled)
            acc = acc + jnp.dot(tap, w_ref[vpi, kk],
                                preferred_element_type=jnp.float32)
        return acc

    for vpi in range(2):
        v = conv1d(hs, vp_cw1, vpi, vp_vec[vpi, _CB1:_CB1 + 1, :])
        v = jnp.maximum(v, 0.0)
        v = _ln(v, vp_vec[vpi, _VLN1G:_VLN1G + 1, :], vp_vec[vpi, _VLN1B:_VLN1B + 1, :])
        # dropout: identity (eval mode)
        v = conv1d(v, vp_cw2, vpi, vp_vec[vpi, _CB2:_CB2 + 1, :])
        v = jnp.maximum(v, 0.0)
        v = _ln(v, vp_vec[vpi, _VLN2G:_VLN2G + 1, :], vp_vec[vpi, _VLN2B:_VLN2B + 1, :])
        # Linear(filter -> 1), computed as (1,F)x(T,F)^T so the result lands lane-dense
        proj = lax.dot_general(vp_vec[vpi, _WL:_WL + 1, :], v,
                               (((1,), (1,)), ((), ())),
                               preferred_element_type=jnp.float32)      # (1, T)
        # TODO(synk): masked_fill(d_masks) is a statically-false no-op when
        # phoneme_lens is None; a length-mask input would be needed otherwise.
        o_ref[0, vpi:vpi + 1, :] = proj + vp_vec[vpi, _BL:_BL + 1, 0:1]


# ---------------- Pallas wrapper ------------------------------------------------
def _run_fused(x, spk, params):
    w_names = ("enc_vec", "enc_qkv", "enc_qkv_b", "enc_wo", "enc_w1",
               "enc_b1", "enc_w2", "final_vec", "vp_cw1", "vp_cw2", "vp_vec")
    weights = [params[n] for n in w_names]
    in_specs = [pl.BlockSpec((1, T, H), lambda b: (b, 0, 0)),     # x
                pl.BlockSpec((1, 1, H), lambda b: (b, 0, 0))]     # speaker emb
    in_specs += [_full_spec(w.shape) for w in weights]            # packed weights
    return pl.pallas_call(
        fused_kernel,
        out_shape=jax.ShapeDtypeStruct((B, 2, T), jnp.float32),   # lane-dense output
        grid=(B,),
        in_specs=in_specs,
        out_specs=pl.BlockSpec((1, 2, T), lambda b: (b, 0, 0)),
        compiler_params=pltpu.CompilerParams(
            dimension_semantics=("parallel",)),   # B=2 -> one element per TC on v7x
    )(x, spk, *weights)


# ---------------- parameter construction (deterministic, synthetic) ------------
def _sinusoidal_pe(length, dim):
    pos = jnp.arange(length, dtype=jnp.float32)[:, None]
    div = jnp.exp(jnp.arange(0, dim, 2, dtype=jnp.float32) * (-math.log(10000.0) / dim))
    pe = jnp.zeros((length, dim), jnp.float32)
    pe = pe.at[:, 0::2].set(jnp.sin(pos * div))
    pe = pe.at[:, 1::2].set(jnp.cos(pos * div))
    return pe


def make_params(key):
    keys = iter(jax.random.split(key, 64))

    def nrm(shape, scale=0.02):
        return (scale * jax.random.normal(next(keys), shape)).astype(jnp.float32)

    ones_h, zeros_h = jnp.ones((H,), jnp.float32), jnp.zeros((H,), jnp.float32)
    ones_f, zeros_f = jnp.ones((VP_FILTER,), jnp.float32), jnp.zeros((VP_FILTER,), jnp.float32)

    params = {
        # Embedding tables; padding_idx=0 -> row 0 is zeros.
        "phoneme_emb": nrm((N_PHONEME, H), 0.1).at[0].set(0.0),
        "accent_emb": nrm((N_ACCENT, H), 0.1).at[0].set(0.0),
        "speaker_emb": nrm((N_SPEAKER, H), 0.1),
        # ScaledPositionalEncoding with alpha = 1.0
        "pos_enc": _sinusoidal_pe(T, H),
        # encoder after_norm gamma / beta
        "final_vec": jnp.stack([ones_h, zeros_h]),                 # (2, H)
    }

    ev, eqkv, eqkvb, ewo, ew1, eb1, ew2 = [], [], [], [], [], [], []
    for _ in range(NUM_LAYERS):
        ev.append(jnp.stack([ones_h, zeros_h,                      # ln1 gamma/beta
                             zeros_h,                              # bo
                             ones_h, zeros_h,                      # ln2 gamma/beta
                             zeros_h]))                            # b2
        eqkv.append(jnp.concatenate([nrm((H, H)), nrm((H, H)), nrm((H, H))], axis=1))
        eqkvb.append(jnp.zeros((1, 3 * H), jnp.float32))           # bq|bk|bv
        ewo.append(nrm((H, H)))
        ew1.append(nrm((H, FFN)))
        eb1.append(jnp.zeros((1, FFN), jnp.float32))
        ew2.append(nrm((FFN, H)))
    params.update(enc_vec=jnp.stack(ev),        # (L, 6, H)
                  enc_qkv=jnp.stack(eqkv),      # (L, H, 3H)
                  enc_qkv_b=jnp.stack(eqkvb),   # (L, 1, 3H)
                  enc_wo=jnp.stack(ewo),        # (L, H, H)
                  enc_w1=jnp.stack(ew1),        # (L, H, FFN)
                  enc_b1=jnp.stack(eb1),        # (L, 1, FFN)
                  enc_w2=jnp.stack(ew2))        # (L, FFN, H)

    cw1, cw2, vvec = [], [], []
    for _ in range(2):                          # 0 = pitch VP, 1 = duration VP
        cw1.append(nrm((VP_KERNEL, H, VP_FILTER)))
        cw2.append(nrm((VP_KERNEL, VP_FILTER, VP_FILTER)))
        bl = nrm(())                            # Linear(F->1) bias scalar
        vvec.append(jnp.stack([zeros_f,                            # conv1 bias
                               ones_f, zeros_f,                    # ln1 gamma/beta
                               zeros_f,                            # conv2 bias
                               ones_f, zeros_f,                    # ln2 gamma/beta
                               nrm((VP_FILTER,)),                  # Linear weight
                               jnp.full((VP_FILTER,), bl)]))       # Linear bias (bcast)
    params.update(vp_cw1=jnp.stack(cw1),        # (2, K, H, F)
                  vp_cw2=jnp.stack(cw2),        # (2, K, F, F)
                  vp_vec=jnp.stack(vvec))       # (2, 8, F)
    return params


# ---------------- forward (tiny gather glue in XLA, everything else fused) ------
def pitch_and_duration_predictor(phonemes, accents, speakers, params):
    # embedding lookups (gather) + positional encoding: glue
    x = params["phoneme_emb"][phonemes] + params["accent_emb"][accents]   # (B, T, H)
    x = x + params["pos_enc"][None, :, :]                                 # alpha * PE, alpha=1
    spk = params["speaker_emb"][speakers][:, None, :]                     # (B, 1, H)

    # fused: encoder layers + after_norm + speaker add + both variance predictors
    out = _run_fused(x, spk, params)                                      # (B, 2, T)

    # phoneme_lens is None -> d_masks all False (masked_fill no-op, dropped in-kernel)
    pitches = out[:, 0, :, None]
    log_durations = out[:, 1, :, None]
    return pitches, log_durations


# ---------------- main ----------------------------------------------------------
if __name__ == "__main__":
    key = jax.random.PRNGKey(0)
    kp, ka, ks, kw = jax.random.split(key, 4)
    phonemes = jax.random.randint(kp, (B, T), 1, N_PHONEME, dtype=jnp.int32)
    accents = jax.random.randint(ka, (B, T), 1, N_ACCENT, dtype=jnp.int32)
    speakers = jax.random.randint(ks, (B,), 0, N_SPEAKER, dtype=jnp.int32)
    params = make_params(kw)

    pitches, log_durations = jax.jit(pitch_and_duration_predictor)(
        phonemes, accents, speakers, params)
    jax.block_until_ready((pitches, log_durations))

    assert pitches.shape == (B, T, 1) and pitches.dtype == jnp.float32
    assert log_durations.shape == (B, T, 1) and log_durations.dtype == jnp.float32
    assert bool(jnp.all(jnp.isfinite(pitches))) and bool(jnp.all(jnp.isfinite(log_durations)))
    print("KERNEL_OK")
</pallas_src>

<mosaic_0001>
module attributes {stable_mosaic.version = 11 : i64} {
  func.func @fused_kernel(%arg0: i32, %arg1: memref<1x8x32xf32, #tpu.memory_space<vmem>>, %arg2: memref<1x1x32xf32, #tpu.memory_space<vmem>>, %arg3: memref<2x6x32xf32, #tpu.memory_space<vmem>>, %arg4: memref<2x32x96xf32, #tpu.memory_space<vmem>>, %arg5: memref<2x1x96xf32, #tpu.memory_space<vmem>>, %arg6: memref<2x32x32xf32, #tpu.memory_space<vmem>>, %arg7: memref<2x32x64xf32, #tpu.memory_space<vmem>>, %arg8: memref<2x1x64xf32, #tpu.memory_space<vmem>>, %arg9: memref<2x64x32xf32, #tpu.memory_space<vmem>>, %arg10: memref<2x32xf32, #tpu.memory_space<vmem>>, %arg11: memref<2x3x32x32xf32, #tpu.memory_space<vmem>>, %arg12: memref<2x3x32x32xf32, #tpu.memory_space<vmem>>, %arg13: memref<2x8x32xf32, #tpu.memory_space<vmem>>, %arg14: memref<1x2x8xf32, #tpu.memory_space<vmem>>) attributes {dimension_semantics = [#tpu.dimension_semantics<parallel>], iteration_bounds = array<i64: 2>, scalar_prefetch = 0 : i64, scratch_operands = 0 : i64, tpu.core_type = #tpu.core_type<tc>, window_params = [{transform_indices = @transform_0, window_bounds = array<i64: 1, 8, 32>}, {transform_indices = @transform_1, window_bounds = array<i64: 1, 1, 32>}, {pipeline_mode = #tpu.pipeline_mode<synchronous>, transform_indices = @transform_2, window_bounds = array<i64: 2, 6, 32>}, {pipeline_mode = #tpu.pipeline_mode<synchronous>, transform_indices = @transform_3, window_bounds = array<i64: 2, 32, 96>}, {pipeline_mode = #tpu.pipeline_mode<synchronous>, transform_indices = @transform_4, window_bounds = array<i64: 2, 1, 96>}, {pipeline_mode = #tpu.pipeline_mode<synchronous>, transform_indices = @transform_5, window_bounds = array<i64: 2, 32, 32>}, {pipeline_mode = #tpu.pipeline_mode<synchronous>, transform_indices = @transform_6, window_bounds = array<i64: 2, 32, 64>}, {pipeline_mode = #tpu.pipeline_mode<synchronous>, transform_indices = @transform_7, window_bounds = array<i64: 2, 1, 64>}, {pipeline_mode = #tpu.pipeline_mode<synchronous>, transform_indices = @transform_8, window_bounds = array<i64: 2, 64, 32>}, {pipeline_mode = #tpu.pipeline_mode<synchronous>, transform_indices = @transform_9, window_bounds = array<i64: 2, 32>}, {pipeline_mode = #tpu.pipeline_mode<synchronous>, transform_indices = @transform_10, window_bounds = array<i64: 2, 3, 32, 32>}, {pipeline_mode = #tpu.pipeline_mode<synchronous>, transform_indices = @transform_11, window_bounds = array<i64: 2, 3, 32, 32>}, {pipeline_mode = #tpu.pipeline_mode<synchronous>, transform_indices = @transform_12, window_bounds = array<i64: 2, 8, 32>}, {transform_indices = @transform_13, window_bounds = array<i64: 1, 2, 8>}]} {
    %c0 = arith.constant 0 : index
    %c0_0 = arith.constant 0 : index
    %c0_1 = arith.constant 0 : index
    %0 = vector.load %arg1[%c0, %c0_0, %c0_1] : memref<1x8x32xf32, #tpu.memory_space<vmem>>, vector<1x8x32xf32>
    %1 = vector.shape_cast %0 : vector<1x8x32xf32> to vector<8x32xf32>
    %c0_2 = arith.constant 0 : index
    %c0_3 = arith.constant 0 : index
    %c0_4 = arith.constant 0 : index
    %2 = vector.load %arg3[%c0_2, %c0_3, %c0_4] : memref<2x6x32xf32, #tpu.memory_space<vmem>>, vector<1x1x32xf32>
    %3 = vector.shape_cast %2 : vector<1x1x32xf32> to vector<1x32xf32>
    %c0_5 = arith.constant 0 : index
    %c1 = arith.constant 1 : index
    %c0_6 = arith.constant 0 : index
    %4 = vector.load %arg3[%c0_5, %c1, %c0_6] : memref<2x6x32xf32, #tpu.memory_space<vmem>>, vector<1x1x32xf32>
    %5 = vector.shape_cast %4 : vector<1x1x32xf32> to vector<1x32xf32>
    %cst = arith.constant dense<0.000000e+00> : vector<8xf32>
    %6 = vector.multi_reduction <add>, %1, %cst [1] : vector<8x32xf32> to vector<8xf32>
    %7 = vector.shape_cast %6 : vector<8xf32> to vector<8x1xf32>
    %cst_7 = arith.constant 3.200000e+01 : f32
    %8 = vector.broadcast %cst_7 : f32 to vector<8x1xf32>
    %9 = arith.divf %7, %8 : vector<8x1xf32>
    %10 = vector.broadcast %9 : vector<8x1xf32> to vector<8x32xf32>
    %11 = arith.subf %1, %10 : vector<8x32xf32>
    %12 = arith.mulf %11, %11 : vector<8x32xf32>
    %cst_8 = arith.constant dense<0.000000e+00> : vector<8xf32>
    %13 = vector.multi_reduction <add>, %12, %cst_8 [1] : vector<8x32xf32> to vector<8xf32>
    %14 = vector.shape_cast %13 : vector<8xf32> to vector<8x1xf32>
    %cst_9 = arith.constant 3.200000e+01 : f32
    %15 = vector.broadcast %cst_9 : f32 to vector<8x1xf32>
    %16 = arith.divf %14, %15 : vector<8x1xf32>
    %17 = vector.broadcast %9 : vector<8x1xf32> to vector<8x32xf32>
    %18 = arith.subf %1, %17 : vector<8x32xf32>
    %cst_10 = arith.constant 9.99999974E-6 : f32
    %19 = vector.broadcast %cst_10 : f32 to vector<8x1xf32>
    %20 = arith.addf %16, %19 : vector<8x1xf32>
    %21 = math.rsqrt %20 : vector<8x1xf32>
    %22 = vector.broadcast %21 : vector<8x1xf32> to vector<8x32xf32>
    %23 = arith.mulf %18, %22 : vector<8x32xf32>
    %24 = vector.broadcast %3 : vector<1x32xf32> to vector<8x32xf32>
    %25 = arith.mulf %23, %24 : vector<8x32xf32>
    %26 = vector.broadcast %5 : vector<1x32xf32> to vector<8x32xf32>
    %27 = arith.addf %25, %26 : vector<8x32xf32>
    %c0_11 = arith.constant 0 : index
    %c0_12 = arith.constant 0 : index
    %c0_13 = arith.constant 0 : index
    %28 = vector.load %arg4[%c0_11, %c0_12, %c0_13] : memref<2x32x96xf32, #tpu.memory_space<vmem>>, vector<1x32x96xf32>
    %29 = vector.shape_cast %28 : vector<1x32x96xf32> to vector<32x96xf32>
    %cst_14 = arith.constant dense<0.000000e+00> : vector<8x96xf32>
    %30 = tpu.matmul %27, %29, %cst_14 {dimension_numbers = #tpu.dot_dimension_numbers<[1], [0], [0], [1], [0, 0, 1, 1], [], []>} : vector<8x32xf32>, vector<32x96xf32>, vector<8x96xf32> -> vector<8x96xf32>
    %c0_15 = arith.constant 0 : index
    %c0_16 = arith.constant 0 : index
    %c0_17 = arith.constant 0 : index
    %31 = vector.load %arg5[%c0_15, %c0_16, %c0_17] : memref<2x1x96xf32, #tpu.memory_space<vmem>>, vector<1x1x96xf32>
    %32 = vector.shape_cast %31 : vector<1x1x96xf32> to vector<1x96xf32>
    %33 = vector.broadcast %32 : vector<1x96xf32> to vector<8x96xf32>
    %34 = arith.addf %30, %33 : vector<8x96xf32>
    %c0_18 = arith.constant 0 : index
    %c2 = arith.constant 2 : index
    %c0_19 = arith.constant 0 : index
    %35 = vector.load %arg3[%c0_18, %c2, %c0_19] : memref<2x6x32xf32, #tpu.memory_space<vmem>>, vector<1x1x32xf32>
    %36 = vector.shape_cast %35 : vector<1x1x32xf32> to vector<1x32xf32>
    %37 = vector.extract_strided_slice %34 {offsets = [0, 0], sizes = [8, 16], strides = [1, 1]} : vector<8x96xf32> to vector<8x16xf32>
    %38 = vector.extract_strided_slice %34 {offsets = [0, 32], sizes = [8, 16], strides = [1, 1]} : vector<8x96xf32> to vector<8x16xf32>
    %39 = vector.extract_strided_slice %34 {offsets = [0, 64], sizes = [8, 16], strides = [1, 1]} : vector<8x96xf32> to vector<8x16xf32>
    %cst_20 = arith.constant dense<0.000000e+00> : vector<8x8xf32>
    %40 = tpu.matmul %37, %38, %cst_20 {dimension_numbers = #tpu.dot_dimension_numbers<[1], [1], [0], [0], [0, 0, 1, 0], [], []>} : vector<8x16xf32>, vector<8x16xf32>, vector<8x8xf32> -> vector<8x8xf32>
    %cst_21 = arith.constant 2.500000e-01 : f32
    %41 = vector.broadcast %cst_21 : f32 to vector<8x8xf32>
    %42 = arith.mulf %40, %41 : vector<8x8xf32>
    %cst_22 = arith.constant dense<0xFF800000> : vector<8xf32>
    %43 = vector.multi_reduction <maximumf>, %42, %cst_22 [1] : vector<8x8xf32> to vector<8xf32>
    %44 = vector.shape_cast %43 : vector<8xf32> to vector<8x1xf32>
    %45 = vector.broadcast %44 : vector<8x1xf32> to vector<8x8xf32>
    %46 = arith.subf %42, %45 : vector<8x8xf32>
    %47 = math.exp %46 : vector<8x8xf32>
    %cst_23 = arith.constant dense<0.000000e+00> : vector<8xf32>
    %48 = vector.multi_reduction <add>, %47, %cst_23 [1] : vector<8x8xf32> to vector<8xf32>
    %49 = vector.shape_cast %48 : vector<8xf32> to vector<8x1xf32>
    %50 = tpu.reciprocal %49 {approx = true} : vector<8x1xf32> -> vector<8x1xf32>
    %51 = vector.broadcast %50 : vector<8x1xf32> to vector<8x8xf32>
    %52 = arith.mulf %47, %51 : vector<8x8xf32>
    %cst_24 = arith.constant dense<0.000000e+00> : vector<8x16xf32>
    %53 = tpu.matmul %52, %39, %cst_24 {dimension_numbers = #tpu.dot_dimension_numbers<[1], [0], [0], [1], [0, 0, 1, 1], [], []>} : vector<8x8xf32>, vector<8x16xf32>, vector<8x16xf32> -> vector<8x16xf32>
    %c0_25 = arith.constant 0 : index
    %c0_26 = arith.constant 0 : index
    %c0_27 = arith.constant 0 : index
    %54 = vector.load %arg6[%c0_25, %c0_26, %c0_27] : memref<2x32x32xf32, #tpu.memory_space<vmem>>, vector<1x16x32xf32>
    %55 = vector.shape_cast %54 : vector<1x16x32xf32> to vector<16x32xf32>
    %cst_28 = arith.constant dense<0.000000e+00> : vector<8x32xf32>
    %56 = tpu.matmul %53, %55, %cst_28 {dimension_numbers = #tpu.dot_dimension_numbers<[1], [0], [0], [1], [0, 0, 1, 1], [], []>} : vector<8x16xf32>, vector<16x32xf32>, vector<8x32xf32> -> vector<8x32xf32>
    %57 = vector.broadcast %36 : vector<1x32xf32> to vector<8x32xf32>
    %58 = arith.addf %57, %56 : vector<8x32xf32>
    %59 = vector.extract_strided_slice %34 {offsets = [0, 16], sizes = [8, 16], strides = [1, 1]} : vector<8x96xf32> to vector<8x16xf32>
    %60 = vector.extract_strided_slice %34 {offsets = [0, 48], sizes = [8, 16], strides = [1, 1]} : vector<8x96xf32> to vector<8x16xf32>
    %61 = vector.extract_strided_slice %34 {offsets = [0, 80], sizes = [8, 16], strides = [1, 1]} : vector<8x96xf32> to vector<8x16xf32>
    %cst_29 = arith.constant dense<0.000000e+00> : vector<8x8xf32>
    %62 = tpu.matmul %59, %60, %cst_29 {dimension_numbers = #tpu.dot_dimension_numbers<[1], [1], [0], [0], [0, 0, 1, 0], [], []>} : vector<8x16xf32>, vector<8x16xf32>, vector<8x8xf32> -> vector<8x8xf32>
    %cst_30 = arith.constant 2.500000e-01 : f32
    %63 = vector.broadcast %cst_30 : f32 to vector<8x8xf32>
    %64 = arith.mulf %62, %63 : vector<8x8xf32>
    %cst_31 = arith.constant dense<0xFF800000> : vector<8xf32>
    %65 = vector.multi_reduction <maximumf>, %64, %cst_31 [1] : vector<8x8xf32> to vector<8xf32>
    %66 = vector.shape_cast %65 : vector<8xf32> to vector<8x1xf32>
    %67 = vector.broadcast %66 : vector<8x1xf32> to vector<8x8xf32>
    %68 = arith.subf %64, %67 : vector<8x8xf32>
    %69 = math.exp %68 : vector<8x8xf32>
    %cst_32 = arith.constant dense<0.000000e+00> : vector<8xf32>
    %70 = vector.multi_reduction <add>, %69, %cst_32 [1] : vector<8x8xf32> to vector<8xf32>
    %71 = vector.shape_cast %70 : vector<8xf32> to vector<8x1xf32>
    %72 = tpu.reciprocal %71 {approx = true} : vector<8x1xf32> -> vector<8x1xf32>
    %73 = vector.broadcast %72 : vector<8x1xf32> to vector<8x8xf32>
    %74 = arith.mulf %69, %73 : vector<8x8xf32>
    %cst_33 = arith.constant dense<0.000000e+00> : vector<8x16xf32>
    %75 = tpu.matmul %74, %61, %cst_33 {dimension_numbers = #tpu.dot_dimension_numbers<[1], [0], [0], [1], [0, 0, 1, 1], [], []>} : vector<8x8xf32>, vector<8x16xf32>, vector<8x16xf32> -> vector<8x16xf32>
    %c0_34 = arith.constant 0 : index
    %c16 = arith.constant 16 : index
    %c0_35 = arith.constant 0 : index
    %76 = vector.load %arg6[%c0_34, %c16, %c0_35] : memref<2x32x32xf32, #tpu.memory_space<vmem>>, vector<1x16x32xf32>
    %77 = vector.shape_cast %76 : vector<1x16x32xf32> to vector<16x32xf32>
    %cst_36 = arith.constant dense<0.000000e+00> : vector<8x32xf32>
    %78 = tpu.matmul %75, %77, %cst_36 {dimension_numbers = #tpu.dot_dimension_numbers<[1], [0], [0], [1], [0, 0, 1, 1], [], []>} : vector<8x16xf32>, vector<16x32xf32>, vector<8x32xf32> -> vector<8x32xf32>
    %79 = arith.addf %58, %78 : vector<8x32xf32>
    %80 = arith.addf %1, %79 : vector<8x32xf32>
    %c0_37 = arith.constant 0 : index
    %c3 = arith.constant 3 : index
    %c0_38 = arith.constant 0 : index
    %81 = vector.load %arg3[%c0_37, %c3, %c0_38] : memref<2x6x32xf32, #tpu.memory_space<vmem>>, vector<1x1x32xf32>
    %82 = vector.shape_cast %81 : vector<1x1x32xf32> to vector<1x32xf32>
    %c0_39 = arith.constant 0 : index
    %c4 = arith.constant 4 : index
    %c0_40 = arith.constant 0 : index
    %83 = vector.load %arg3[%c0_39, %c4, %c0_40] : memref<2x6x32xf32, #tpu.memory_space<vmem>>, vector<1x1x32xf32>
    %84 = vector.shape_cast %83 : vector<1x1x32xf32> to vector<1x32xf32>
    %cst_41 = arith.constant dense<0.000000e+00> : vector<8xf32>
    %85 = vector.multi_reduction <add>, %80, %cst_41 [1] : vector<8x32xf32> to vector<8xf32>
    %86 = vector.shape_cast %85 : vector<8xf32> to vector<8x1xf32>
    %cst_42 = arith.constant 3.200000e+01 : f32
    %87 = vector.broadcast %cst_42 : f32 to vector<8x1xf32>
    %88 = arith.divf %86, %87 : vector<8x1xf32>
    %89 = vector.broadcast %88 : vector<8x1xf32> to vector<8x32xf32>
    %90 = arith.subf %80, %89 : vector<8x32xf32>
    %91 = arith.mulf %90, %90 : vector<8x32xf32>
    %cst_43 = arith.constant dense<0.000000e+00> : vector<8xf32>
    %92 = vector.multi_reduction <add>, %91, %cst_43 [1] : vector<8x32xf32> to vector<8xf32>
    %93 = vector.shape_cast %92 : vector<8xf32> to vector<8x1xf32>
    %cst_44 = arith.constant 3.200000e+01 : f32
    %94 = vector.broadcast %cst_44 : f32 to vector<8x1xf32>
    %95 = arith.divf %93, %94 : vector<8x1xf32>
    %96 = vector.broadcast %88 : vector<8x1xf32> to vector<8x32xf32>
    %97 = arith.subf %80, %96 : vector<8x32xf32>
    %cst_45 = arith.constant 9.99999974E-6 : f32
    %98 = vector.broadcast %cst_45 : f32 to vector<8x1xf32>
    %99 = arith.addf %95, %98 : vector<8x1xf32>
    %100 = math.rsqrt %99 : vector<8x1xf32>
    %101 = vector.broadcast %100 : vector<8x1xf32> to vector<8x32xf32>
    %102 = arith.mulf %97, %101 : vector<8x32xf32>
    %103 = vector.broadcast %82 : vector<1x32xf32> to vector<8x32xf32>
    %104 = arith.mulf %102, %103 : vector<8x32xf32>
    %105 = vector.broadcast %84 : vector<1x32xf32> to vector<8x32xf32>
    %106 = arith.addf %104, %105 : vector<8x32xf32>
    %c0_46 = arith.constant 0 : index
    %c0_47 = arith.constant 0 : index
    %c0_48 = arith.constant 0 : index
    %107 = vector.load %arg7[%c0_46, %c0_47, %c0_48] : memref<2x32x64xf32, #tpu.memory_space<vmem>>, vector<1x32x64xf32>
    %108 = vector.shape_cast %107 : vector<1x32x64xf32> to vector<32x64xf32>
    %cst_49 = arith.constant dense<0.000000e+00> : vector<8x64xf32>
    %109 = tpu.matmul %106, %108, %cst_49 {dimension_numbers = #tpu.dot_dimension_numbers<[1], [0], [0], [1], [0, 0, 1, 1], [], []>} : vector<8x32xf32>, vector<32x64xf32>, vector<8x64xf32> -> vector<8x64xf32>
    %c0_50 = arith.constant 0 : index
    %c0_51 = arith.constant 0 : index
    %c0_52 = arith.constant 0 : index
    %110 = vector.load %arg8[%c0_50, %c0_51, %c0_52] : memref<2x1x64xf32, #tpu.memory_space<vmem>>, vector<1x1x64xf32>
    %111 = vector.shape_cast %110 : vector<1x1x64xf32> to vector<1x64xf32>
    %112 = vector.broadcast %111 : vector<1x64xf32> to vector<8x64xf32>
    %113 = arith.addf %109, %112 : vector<8x64xf32>
    %cst_53 = arith.constant 0.000000e+00 : f32
    %114 = vector.broadcast %cst_53 : f32 to vector<8x64xf32>
    %115 = arith.maximumf %113, %114 : vector<8x64xf32>
    %c0_54 = arith.constant 0 : index
    %c0_55 = arith.constant 0 : index
    %c0_56 = arith.constant 0 : index
    %116 = vector.load %arg9[%c0_54, %c0_55, %c0_56] : memref<2x64x32xf32, #tpu.memory_space<vmem>>, vector<1x64x32xf32>
    %117 = vector.shape_cast %116 : vector<1x64x32xf32> to vector<64x32xf32>
    %cst_57 = arith.constant dense<0.000000e+00> : vector<8x32xf32>
    %118 = tpu.matmul %115, %117, %cst_57 {dimension_numbers = #tpu.dot_dimension_numbers<[1], [0], [0], [1], [0, 0, 1, 1], [], []>} : vector<8x64xf32>, vector<64x32xf32>, vector<8x32xf32> -> vector<8x32xf32>
    %c0_58 = arith.constant 0 : index
    %c5 = arith.constant 5 : index
    %c0_59 = arith.constant 0 : index
    %119 = vector.load %arg3[%c0_58, %c5, %c0_59] : memref<2x6x32xf32, #tpu.memory_space<vmem>>, vector<1x1x32xf32>
    %120 = vector.shape_cast %119 : vector<1x1x32xf32> to vector<1x32xf32>
    %121 = vector.broadcast %120 : vector<1x32xf32> to vector<8x32xf32>
    %122 = arith.addf %118, %121 : vector<8x32xf32>
    %123 = arith.addf %80, %122 : vector<8x32xf32>
    %c1_60 = arith.constant 1 : index
    %c0_61 = arith.constant 0 : index
    %c0_62 = arith.constant 0 : index
    %124 = vector.load %arg3[%c1_60, %c0_61, %c0_62] : memref<2x6x32xf32, #tpu.memory_space<vmem>>, vector<1x1x32xf32>
    %125 = vector.shape_cast %124 : vector<1x1x32xf32> to vector<1x32xf32>
    %c1_63 = arith.constant 1 : index
    %c1_64 = arith.constant 1 : index
    %c0_65 = arith.constant 0 : index
    %126 = vector.load %arg3[%c1_63, %c1_64, %c0_65] : memref<2x6x32xf32, #tpu.memory_space<vmem>>, vector<1x1x32xf32>
    %127 = vector.shape_cast %126 : vector<1x1x32xf32> to vector<1x32xf32>
    %cst_66 = arith.constant dense<0.000000e+00> : vector<8xf32>
    %128 = vector.multi_reduction <add>, %123, %cst_66 [1] : vector<8x32xf32> to vector<8xf32>
    %129 = vector.shape_cast %128 : vector<8xf32> to vector<8x1xf32>
    %cst_67 = arith.constant 3.200000e+01 : f32
    %130 = vector.broadcast %cst_67 : f32 to vector<8x1xf32>
    %131 = arith.divf %129, %130 : vector<8x1xf32>
    %132 = vector.broadcast %131 : vector<8x1xf32> to vector<8x32xf32>
    %133 = arith.subf %123, %132 : vector<8x32xf32>
    %134 = arith.mulf %133, %133 : vector<8x32xf32>
    %cst_68 = arith.constant dense<0.000000e+00> : vector<8xf32>
    %135 = vector.multi_reduction <add>, %134, %cst_68 [1] : vector<8x32xf32> to vector<8xf32>
    %136 = vector.shape_cast %135 : vector<8xf32> to vector<8x1xf32>
    %cst_69 = arith.constant 3.200000e+01 : f32
    %137 = vector.broadcast %cst_69 : f32 to vector<8x1xf32>
    %138 = arith.divf %136, %137 : vector<8x1xf32>
    %139 = vector.broadcast %131 : vector<8x1xf32> to vector<8x32xf32>
    %140 = arith.subf %123, %139 : vector<8x32xf32>
    %cst_70 = arith.constant 9.99999974E-6 : f32
    %141 = vector.broadcast %cst_70 : f32 to vector<8x1xf32>
    %142 = arith.addf %138, %141 : vector<8x1xf32>
    %143 = math.rsqrt %142 : vector<8x1xf32>
    %144 = vector.broadcast %143 : vector<8x1xf32> to vector<8x32xf32>
    %145 = arith.mulf %140, %144 : vector<8x32xf32>
    %146 = vector.broadcast %125 : vector<1x32xf32> to vector<8x32xf32>
    %147 = arith.mulf %145, %146 : vector<8x32xf32>
    %148 = vector.broadcast %127 : vector<1x32xf32> to vector<8x32xf32>
    %149 = arith.addf %147, %148 : vector<8x32xf32>
    %c1_71 = arith.constant 1 : index
    %c0_72 = arith.constant 0 : index
    %c0_73 = arith.constant 0 : index
    %150 = vector.load %arg4[%c1_71, %c0_72, %c0_73] : memref<2x32x96xf32, #tpu.memory_space<vmem>>, vector<1x32x96xf32>
    %151 = vector.shape_cast %150 : vector<1x32x96xf32> to vector<32x96xf32>
    %cst_74 = arith.constant dense<0.000000e+00> : vector<8x96xf32>
    %152 = tpu.matmul %149, %151, %cst_74 {dimension_numbers = #tpu.dot_dimension_numbers<[1], [0], [0], [1], [0, 0, 1, 1], [], []>} : vector<8x32xf32>, vector<32x96xf32>, vector<8x96xf32> -> vector<8x96xf32>
    %c1_75 = arith.constant 1 : index
    %c0_76 = arith.constant 0 : index
    %c0_77 = arith.constant 0 : index
    %153 = vector.load %arg5[%c1_75, %c0_76, %c0_77] : memref<2x1x96xf32, #tpu.memory_space<vmem>>, vector<1x1x96xf32>
    %154 = vector.shape_cast %153 : vector<1x1x96xf32> to vector<1x96xf32>
    %155 = vector.broadcast %154 : vector<1x96xf32> to vector<8x96xf32>
    %156 = arith.addf %152, %155 : vector<8x96xf32>
    %c1_78 = arith.constant 1 : index
    %c2_79 = arith.constant 2 : index
    %c0_80 = arith.constant 0 : index
    %157 = vector.load %arg3[%c1_78, %c2_79, %c0_80] : memref<2x6x32xf32, #tpu.memory_space<vmem>>, vector<1x1x32xf32>
    %158 = vector.shape_cast %157 : vector<1x1x32xf32> to vector<1x32xf32>
    %159 = vector.extract_strided_slice %156 {offsets = [0, 0], sizes = [8, 16], strides = [1, 1]} : vector<8x96xf32> to vector<8x16xf32>
    %160 = vector.extract_strided_slice %156 {offsets = [0, 32], sizes = [8, 16], strides = [1, 1]} : vector<8x96xf32> to vector<8x16xf32>
    %161 = vector.extract_strided_slice %156 {offsets = [0, 64], sizes = [8, 16], strides = [1, 1]} : vector<8x96xf32> to vector<8x16xf32>
    %cst_81 = arith.constant dense<0.000000e+00> : vector<8x8xf32>
    %162 = tpu.matmul %159, %160, %cst_81 {dimension_numbers = #tpu.dot_dimension_numbers<[1], [1], [0], [0], [0, 0, 1, 0], [], []>} : vector<8x16xf32>, vector<8x16xf32>, vector<8x8xf32> -> vector<8x8xf32>
    %cst_82 = arith.constant 2.500000e-01 : f32
    %163 = vector.broadcast %cst_82 : f32 to vector<8x8xf32>
    %164 = arith.mulf %162, %163 : vector<8x8xf32>
    %cst_83 = arith.constant dense<0xFF800000> : vector<8xf32>
    %165 = vector.multi_reduction <maximumf>, %164, %cst_83 [1] : vector<8x8xf32> to vector<8xf32>
    %166 = vector.shape_cast %165 : vector<8xf32> to vector<8x1xf32>
    %167 = vector.broadcast %166 : vector<8x1xf32> to vector<8x8xf32>
    %168 = arith.subf %164, %167 : vector<8x8xf32>
    %169 = math.exp %168 : vector<8x8xf32>
    %cst_84 = arith.constant dense<0.000000e+00> : vector<8xf32>
    %170 = vector.multi_reduction <add>, %169, %cst_84 [1] : vector<8x8xf32> to vector<8xf32>
    %171 = vector.shape_cast %170 : vector<8xf32> to vector<8x1xf32>
    %172 = tpu.reciprocal %171 {approx = true} : vector<8x1xf32> -> vector<8x1xf32>
    %173 = vector.broadcast %172 : vector<8x1xf32> to vector<8x8xf32>
    %174 = arith.mulf %169, %173 : vector<8x8xf32>
    %cst_85 = arith.constant dense<0.000000e+00> : vector<8x16xf32>
    %175 = tpu.matmul %174, %161, %cst_85 {dimension_numbers = #tpu.dot_dimension_numbers<[1], [0], [0], [1], [0, 0, 1, 1], [], []>} : vector<8x8xf32>, vector<8x16xf32>, vector<8x16xf32> -> vector<8x16xf32>
    %c1_86 = arith.constant 1 : index
    %c0_87 = arith.constant 0 : index
    %c0_88 = arith.constant 0 : index
    %176 = vector.load %arg6[%c1_86, %c0_87, %c0_88] : memref<2x32x32xf32, #tpu.memory_space<vmem>>, vector<1x16x32xf32>
    %177 = vector.shape_cast %176 : vector<1x16x32xf32> to vector<16x32xf32>
    %cst_89 = arith.constant dense<0.000000e+00> : vector<8x32xf32>
    %178 = tpu.matmul %175, %177, %cst_89 {dimension_numbers = #tpu.dot_dimension_numbers<[1], [0], [0], [1], [0, 0, 1, 1], [], []>} : vector<8x16xf32>, vector<16x32xf32>, vector<8x32xf32> -> vector<8x32xf32>
    %179 = vector.broadcast %158 : vector<1x32xf32> to vector<8x32xf32>
    %180 = arith.addf %179, %178 : vector<8x32xf32>
    %181 = vector.extract_strided_slice %156 {offsets = [0, 16], sizes = [8, 16], strides = [1, 1]} : vector<8x96xf32> to vector<8x16xf32>
    %182 = vector.extract_strided_slice %156 {offsets = [0, 48], sizes = [8, 16], strides = [1, 1]} : vector<8x96xf32> to vector<8x16xf32>
    %183 = vector.extract_strided_slice %156 {offsets = [0, 80], sizes = [8, 16], strides = [1, 1]} : vector<8x96xf32> to vector<8x16xf32>
    %cst_90 = arith.constant dense<0.000000e+00> : vector<8x8xf32>
    %184 = tpu.matmul %181, %182, %cst_90 {dimension_numbers = #tpu.dot_dimension_numbers<[1], [1], [0], [0], [0, 0, 1, 0], [], []>} : vector<8x16xf32>, vector<8x16xf32>, vector<8x8xf32> -> vector<8x8xf32>
    %cst_91 = arith.constant 2.500000e-01 : f32
    %185 = vector.broadcast %cst_91 : f32 to vector<8x8xf32>
    %186 = arith.mulf %184, %185 : vector<8x8xf32>
    %cst_92 = arith.constant dense<0xFF800000> : vector<8xf32>
    %187 = vector.multi_reduction <maximumf>, %186, %cst_92 [1] : vector<8x8xf32> to vector<8xf32>
    %188 = vector.shape_cast %187 : vector<8xf32> to vector<8x1xf32>
    %189 = vector.broadcast %188 : vector<8x1xf32> to vector<8x8xf32>
    %190 = arith.subf %186, %189 : vector<8x8xf32>
    %191 = math.exp %190 : vector<8x8xf32>
    %cst_93 = arith.constant dense<0.000000e+00> : vector<8xf32>
    %192 = vector.multi_reduction <add>, %191, %cst_93 [1] : vector<8x8xf32> to vector<8xf32>
    %193 = vector.shape_cast %192 : vector<8xf32> to vector<8x1xf32>
    %194 = tpu.reciprocal %193 {approx = true} : vector<8x1xf32> -> vector<8x1xf32>
    %195 = vector.broadcast %194 : vector<8x1xf32> to vector<8x8xf32>
    %196 = arith.mulf %191, %195 : vector<8x8xf32>
    %cst_94 = arith.constant dense<0.000000e+00> : vector<8x16xf32>
    %197 = tpu.matmul %196, %183, %cst_94 {dimension_numbers = #tpu.dot_dimension_numbers<[1], [0], [0], [1], [0, 0, 1, 1], [], []>} : vector<8x8xf32>, vector<8x16xf32>, vector<8x16xf32> -> vector<8x16xf32>
    %c1_95 = arith.constant 1 : index
    %c16_96 = arith.constant 16 : index
    %c0_97 = arith.constant 0 : index
    %198 = vector.load %arg6[%c1_95, %c16_96, %c0_97] : memref<2x32x32xf32, #tpu.memory_space<vmem>>, vector<1x16x32xf32>
    %199 = vector.shape_cast %198 : vector<1x16x32xf32> to vector<16x32xf32>
    %cst_98 = arith.constant dense<0.000000e+00> : vector<8x32xf32>
    %200 = tpu.matmul %197, %199, %cst_98 {dimension_numbers = #tpu.dot_dimension_numbers<[1], [0], [0], [1], [0, 0, 1, 1], [], []>} : vector<8x16xf32>, vector<16x32xf32>, vector<8x32xf32> -> vector<8x32xf32>
    %201 = arith.addf %180, %200 : vector<8x32xf32>
    %202 = arith.addf %123, %201 : vector<8x32xf32>
    %c1_99 = arith.constant 1 : index
    %c3_100 = arith.constant 3 : index
    %c0_101 = arith.constant 0 : index
    %203 = vector.load %arg3[%c1_99, %c3_100, %c0_101] : memref<2x6x32xf32, #tpu.memory_space<vmem>>, vector<1x1x32xf32>
    %204 = vector.shape_cast %203 : vector<1x1x32xf32> to vector<1x32xf32>
    %c1_102 = arith.constant 1 : index
    %c4_103 = arith.constant 4 : index
    %c0_104 = arith.constant 0 : index
    %205 = vector.load %arg3[%c1_102, %c4_103, %c0_104] : memref<2x6x32xf32, #tpu.memory_space<vmem>>, vector<1x1x32xf32>
    %206 = vector.shape_cast %205 : vector<1x1x32xf32> to vector<1x32xf32>
    %cst_105 = arith.constant dense<0.000000e+00> : vector<8xf32>
    %207 = vector.multi_reduction <add>, %202, %cst_105 [1] : vector<8x32xf32> to vector<8xf32>
    %208 = vector.shape_cast %207 : vector<8xf32> to vector<8x1xf32>
    %cst_106 = arith.constant 3.200000e+01 : f32
    %209 = vector.broadcast %cst_106 : f32 to vector<8x1xf32>
    %210 = arith.divf %208, %209 : vector<8x1xf32>
    %211 = vector.broadcast %210 : vector<8x1xf32> to vector<8x32xf32>
    %212 = arith.subf %202, %211 : vector<8x32xf32>
    %213 = arith.mulf %212, %212 : vector<8x32xf32>
    %cst_107 = arith.constant dense<0.000000e+00> : vector<8xf32>
    %214 = vector.multi_reduction <add>, %213, %cst_107 [1] : vector<8x32xf32> to vector<8xf32>
    %215 = vector.shape_cast %214 : vector<8xf32> to vector<8x1xf32>
    %cst_108 = arith.constant 3.200000e+01 : f32
    %216 = vector.broadcast %cst_108 : f32 to vector<8x1xf32>
    %217 = arith.divf %215, %216 : vector<8x1xf32>
    %218 = vector.broadcast %210 : vector<8x1xf32> to vector<8x32xf32>
    %219 = arith.subf %202, %218 : vector<8x32xf32>
    %cst_109 = arith.constant 9.99999974E-6 : f32
    %220 = vector.broadcast %cst_109 : f32 to vector<8x1xf32>
    %221 = arith.addf %217, %220 : vector<8x1xf32>
    %222 = math.rsqrt %221 : vector<8x1xf32>
    %223 = vector.broadcast %222 : vector<8x1xf32> to vector<8x32xf32>
    %224 = arith.mulf %219, %223 : vector<8x32xf32>
    %225 = vector.broadcast %204 : vector<1x32xf32> to vector<8x32xf32>
    %226 = arith.mulf %224, %225 : vector<8x32xf32>
    %227 = vector.broadcast %206 : vector<1x32xf32> to vector<8x32xf32>
    %228 = arith.addf %226, %227 : vector<8x32xf32>
    %c1_110 = arith.constant 1 : index
    %c0_111 = arith.constant 0 : index
    %c0_112 = arith.constant 0 : index
    %229 = vector.load %arg7[%c1_110, %c0_111, %c0_112] : memref<2x32x64xf32, #tpu.memory_space<vmem>>, vector<1x32x64xf32>
    %230 = vector.shape_cast %229 : vector<1x32x64xf32> to vector<32x64xf32>
    %cst_113 = arith.constant dense<0.000000e+00> : vector<8x64xf32>
    %231 = tpu.matmul %228, %230, %cst_113 {dimension_numbers = #tpu.dot_dimension_numbers<[1], [0], [0], [1], [0, 0, 1, 1], [], []>} : vector<8x32xf32>, vector<32x64xf32>, vector<8x64xf32> -> vector<8x64xf32>
    %c1_114 = arith.constant 1 : index
    %c0_115 = arith.constant 0 : index
    %c0_116 = arith.constant 0 : index
    %232 = vector.load %arg8[%c1_114, %c0_115, %c0_116] : memref<2x1x64xf32, #tpu.memory_space<vmem>>, vector<1x1x64xf32>
    %233 = vector.shape_cast %232 : vector<1x1x64xf32> to vector<1x64xf32>
    %234 = vector.broadcast %233 : vector<1x64xf32> to vector<8x64xf32>
    %235 = arith.addf %231, %234 : vector<8x64xf32>
    %cst_117 = arith.constant 0.000000e+00 : f32
    %236 = vector.broadcast %cst_117 : f32 to vector<8x64xf32>
    %237 = arith.maximumf %235, %236 : vector<8x64xf32>
    %c1_118 = arith.constant 1 : index
    %c0_119 = arith.constant 0 : index
    %c0_120 = arith.constant 0 : index
    %238 = vector.load %arg9[%c1_118, %c0_119, %c0_120] : memref<2x64x32xf32, #tpu.memory_space<vmem>>, vector<1x64x32xf32>
    %239 = vector.shape_cast %238 : vector<1x64x32xf32> to vector<64x32xf32>
    %cst_121 = arith.constant dense<0.000000e+00> : vector<8x32xf32>
    %240 = tpu.matmul %237, %239, %cst_121 {dimension_numbers = #tpu.dot_dimension_numbers<[1], [0], [0], [1], [0, 0, 1, 1], [], []>} : vector<8x64xf32>, vector<64x32xf32>, vector<8x32xf32> -> vector<8x32xf32>
    %c1_122 = arith.constant 1 : index
    %c5_123 = arith.constant 5 : index
    %c0_124 = arith.constant 0 : index
    %241 = vector.load %arg3[%c1_122, %c5_123, %c0_124] : memref<2x6x32xf32, #tpu.memory_space<vmem>>, vector<1x1x32xf32>
    %242 = vector.shape_cast %241 : vector<1x1x32xf32> to vector<1x32xf32>
    %243 = vector.broadcast %242 : vector<1x32xf32> to vector<8x32xf32>
    %244 = arith.addf %240, %243 : vector<8x32xf32>
    %245 = arith.addf %202, %244 : vector<8x32xf32>
    %c0_125 = arith.constant 0 : index
    %c0_126 = arith.constant 0 : index
    %246 = vector.load %arg10[%c0_125, %c0_126] : memref<2x32xf32, #tpu.memory_space<vmem>>, vector<1x32xf32>
    %c1_127 = arith.constant 1 : index
    %c0_128 = arith.constant 0 : index
    %247 = vector.load %arg10[%c1_127, %c0_128] : memref<2x32xf32, #tpu.memory_space<vmem>>, vector<1x32xf32>
    %cst_129 = arith.constant dense<0.000000e+00> : vector<8xf32>
    %248 = vector.multi_reduction <add>, %245, %cst_129 [1] : vector<8x32xf32> to vector<8xf32>
    %249 = vector.shape_cast %248 : vector<8xf32> to vector<8x1xf32>
    %cst_130 = arith.constant 3.200000e+01 : f32
    %250 = vector.broadcast %cst_130 : f32 to vector<8x1xf32>
    %251 = arith.divf %249, %250 : vector<8x1xf32>
    %252 = vector.broadcast %251 : vector<8x1xf32> to vector<8x32xf32>
    %253 = arith.subf %245, %252 : vector<8x32xf32>
    %254 = arith.mulf %253, %253 : vector<8x32xf32>
    %cst_131 = arith.constant dense<0.000000e+00> : vector<8xf32>
    %255 = vector.multi_reduction <add>, %254, %cst_131 [1] : vector<8x32xf32> to vector<8xf32>
    %256 = vector.shape_cast %255 : vector<8xf32> to vector<8x1xf32>
    %cst_132 = arith.constant 3.200000e+01 : f32
    %257 = vector.broadcast %cst_132 : f32 to vector<8x1xf32>
    %258 = arith.divf %256, %257 : vector<8x1xf32>
    %259 = vector.broadcast %251 : vector<8x1xf32> to vector<8x32xf32>
    %260 = arith.subf %245, %259 : vector<8x32xf32>
    %cst_133 = arith.constant 9.99999974E-6 : f32
    %261 = vector.broadcast %cst_133 : f32 to vector<8x1xf32>
    %262 = arith.addf %258, %261 : vector<8x1xf32>
    %263 = math.rsqrt %262 : vector<8x1xf32>
    %264 = vector.broadcast %263 : vector<8x1xf32> to vector<8x32xf32>
    %265 = arith.mulf %260, %264 : vector<8x32xf32>
    %266 = vector.broadcast %246 : vector<1x32xf32> to vector<8x32xf32>
    %267 = arith.mulf %265, %266 : vector<8x32xf32>
    %268 = vector.broadcast %247 : vector<1x32xf32> to vector<8x32xf32>
    %269 = arith.addf %267, %268 : vector<8x32xf32>
    %c0_134 = arith.constant 0 : index
    %c0_135 = arith.constant 0 : index
    %c0_136 = arith.constant 0 : index
    %270 = vector.load %arg2[%c0_134, %c0_135, %c0_136] : memref<1x1x32xf32, #tpu.memory_space<vmem>>, vector<1x1x32xf32>
    %271 = vector.shape_cast %270 : vector<1x1x32xf32> to vector<1x32xf32>
    %272 = vector.broadcast %271 : vector<1x32xf32> to vector<8x32xf32>
    %273 = arith.addf %269, %272 : vector<8x32xf32>
    %274 = tpu.iota {dimensions = array<i32: 0>} : vector<8x1xi32>
    %c0_137 = arith.constant 0 : index
    %c0_138 = arith.constant 0 : index
    %c0_139 = arith.constant 0 : index
    %275 = vector.load %arg13[%c0_137, %c0_138, %c0_139] : memref<2x8x32xf32, #tpu.memory_space<vmem>>, vector<1x1x32xf32>
    %276 = vector.shape_cast %275 : vector<1x1x32xf32> to vector<1x32xf32>
    %c1_i32 = arith.constant 1 : i32
    %277 = tpu.dynamic_rotate %273 by %c1_i32 dim 0 : vector<8x32xf32>, i32 -> vector<8x32xf32>
    %c1_i32_140 = arith.constant 1 : i32
    %278 = vector.broadcast %c1_i32_140 : i32 to vector<8x1xi32>
    %279 = arith.cmpi slt, %274, %278 : vector<8x1xi32>
    %cst_141 = arith.constant 0.000000e+00 : f32
    %280 = vector.shape_cast %279 : vector<8x1xi1> to vector<8x1xi1>
    %281 = vector.broadcast %280 : vector<8x1xi1> to vector<8x32xi1>
    %282 = vector.broadcast %cst_141 : f32 to vector<8x32xf32>
    %283 = arith.select %281, %282, %277 : vector<8x32xi1>, vector<8x32xf32>
    %c0_142 = arith.constant 0 : index
    %c0_143 = arith.constant 0 : index
    %c0_144 = arith.constant 0 : index
    %c0_145 = arith.constant 0 : index
    %284 = vector.load %arg11[%c0_142, %c0_143, %c0_144, %c0_145] : memref<2x3x32x32xf32, #tpu.memory_space<vmem>>, vector<1x1x32x32xf32>
    %285 = vector.shape_cast %284 : vector<1x1x32x32xf32> to vector<32x32xf32>
    %cst_146 = arith.constant dense<0.000000e+00> : vector<8x32xf32>
    %286 = tpu.matmul %283, %285, %cst_146 {dimension_numbers = #tpu.dot_dimension_numbers<[1], [0], [0], [1], [0, 0, 1, 1], [], []>} : vector<8x32xf32>, vector<32x32xf32>, vector<8x32xf32> -> vector<8x32xf32>
    %287 = vector.broadcast %276 : vector<1x32xf32> to vector<8x32xf32>
    %288 = arith.addf %287, %286 : vector<8x32xf32>
    %c0_147 = arith.constant 0 : index
    %c1_148 = arith.constant 1 : index
    %c0_149 = arith.constant 0 : index
    %c0_150 = arith.constant 0 : index
    %289 = vector.load %arg11[%c0_147, %c1_148, %c0_149, %c0_150] : memref<2x3x32x32xf32, #tpu.memory_space<vmem>>, vector<1x1x32x32xf32>
    %290 = vector.shape_cast %289 : vector<1x1x32x32xf32> to vector<32x32xf32>
    %cst_151 = arith.constant dense<0.000000e+00> : vector<8x32xf32>
    %291 = tpu.matmul %273, %290, %cst_151 {dimension_numbers = #tpu.dot_dimension_numbers<[1], [0], [0], [1], [0, 0, 1, 1], [], []>} : vector<8x32xf32>, vector<32x32xf32>, vector<8x32xf32> -> vector<8x32xf32>
    %292 = arith.addf %288, %291 : vector<8x32xf32>
    %c7_i32 = arith.constant 7 : i32
    %293 = tpu.dynamic_rotate %273 by %c7_i32 dim 0 : vector<8x32xf32>, i32 -> vector<8x32xf32>
    %c7_i32_152 = arith.constant 7 : i32
    %294 = vector.broadcast %c7_i32_152 : i32 to vector<8x1xi32>
    %295 = arith.cmpi sge, %274, %294 : vector<8x1xi32>
    %cst_153 = arith.constant 0.000000e+00 : f32
    %296 = vector.shape_cast %295 : vector<8x1xi1> to vector<8x1xi1>
    %297 = vector.broadcast %296 : vector<8x1xi1> to vector<8x32xi1>
    %298 = vector.broadcast %cst_153 : f32 to vector<8x32xf32>
    %299 = arith.select %297, %298, %293 : vector<8x32xi1>, vector<8x32xf32>
    %c0_154 = arith.constant 0 : index
    %c2_155 = arith.constant 2 : index
    %c0_156 = arith.constant 0 : index
    %c0_157 = arith.constant 0 : index
    %300 = vector.load %arg11[%c0_154, %c2_155, %c0_156, %c0_157] : memref<2x3x32x32xf32, #tpu.memory_space<vmem>>, vector<1x1x32x32xf32>
    %301 = vector.shape_cast %300 : vector<1x1x32x32xf32> to vector<32x32xf32>
    %cst_158 = arith.constant dense<0.000000e+00> : vector<8x32xf32>
    %302 = tpu.matmul %299, %301, %cst_158 {dimension_numbers = #tpu.dot_dimension_numbers<[1], [0], [0], [1], [0, 0, 1, 1], [], []>} : vector<8x32xf32>, vector<32x32xf32>, vector<8x32xf32> -> vector<8x32xf32>
    %303 = arith.addf %292, %302 : vector<8x32xf32>
    %cst_159 = arith.constant 0.000000e+00 : f32
    %304 = vector.broadcast %cst_159 : f32 to vector<8x32xf32>
    %305 = arith.maximumf %303, %304 : vector<8x32xf32>
    %c0_160 = arith.constant 0 : index
    %c1_161 = arith.constant 1 : index
    %c0_162 = arith.constant 0 : index
    %306 = vector.load %arg13[%c0_160, %c1_161, %c0_162] : memref<2x8x32xf32, #tpu.memory_space<vmem>>, vector<1x1x32xf32>
    %307 = vector.shape_cast %306 : vector<1x1x32xf32> to vector<1x32xf32>
    %c0_163 = arith.constant 0 : index
    %c2_164 = arith.constant 2 : index
    %c0_165 = arith.constant 0 : index
    %308 = vector.load %arg13[%c0_163, %c2_164, %c0_165] : memref<2x8x32xf32, #tpu.memory_space<vmem>>, vector<1x1x32xf32>
    %309 = vector.shape_cast %308 : vector<1x1x32xf32> to vector<1x32xf32>
    %cst_166 = arith.constant dense<0.000000e+00> : vector<8xf32>
    %310 = vector.multi_reduction <add>, %305, %cst_166 [1] : vector<8x32xf32> to vector<8xf32>
    %311 = vector.shape_cast %310 : vector<8xf32> to vector<8x1xf32>
    %cst_167 = arith.constant 3.200000e+01 : f32
    %312 = vector.broadcast %cst_167 : f32 to vector<8x1xf32>
    %313 = arith.divf %311, %312 : vector<8x1xf32>
    %314 = vector.broadcast %313 : vector<8x1xf32> to vector<8x32xf32>
    %315 = arith.subf %305, %314 : vector<8x32xf32>
    %316 = arith.mulf %315, %315 : vector<8x32xf32>
    %cst_168 = arith.constant dense<0.000000e+00> : vector<8xf32>
    %317 = vector.multi_reduction <add>, %316, %cst_168 [1] : vector<8x32xf32> to vector<8xf32>
    %318 = vector.shape_cast %317 : vector<8xf32> to vector<8x1xf32>
    %cst_169 = arith.constant 3.200000e+01 : f32
    %319 = vector.broadcast %cst_169 : f32 to vector<8x1xf32>
    %320 = arith.divf %318, %319 : vector<8x1xf32>
    %321 = vector.broadcast %313 : vector<8x1xf32> to vector<8x32xf32>
    %322 = arith.subf %305, %321 : vector<8x32xf32>
    %cst_170 = arith.constant 9.99999974E-6 : f32
    %323 = vector.broadcast %cst_170 : f32 to vector<8x1xf32>
    %324 = arith.addf %320, %323 : vector<8x1xf32>
    %325 = math.rsqrt %324 : vector<8x1xf32>
    %326 = vector.broadcast %325 : vector<8x1xf32> to vector<8x32xf32>
    %327 = arith.mulf %322, %326 : vector<8x32xf32>
    %328 = vector.broadcast %307 : vector<1x32xf32> to vector<8x32xf32>
    %329 = arith.mulf %327, %328 : vector<8x32xf32>
    %330 = vector.broadcast %309 : vector<1x32xf32> to vector<8x32xf32>
    %331 = arith.addf %329, %330 : vector<8x32xf32>
    %c0_171 = arith.constant 0 : index
    %c3_172 = arith.constant 3 : index
    %c0_173 = arith.constant 0 : index
    %332 = vector.load %arg13[%c0_171, %c3_172, %c0_173] : memref<2x8x32xf32, #tpu.memory_space<vmem>>, vector<1x1x32xf32>
    %333 = vector.shape_cast %332 : vector<1x1x32xf32> to vector<1x32xf32>
    %c1_i32_174 = arith.constant 1 : i32
    %334 = tpu.dynamic_rotate %331 by %c1_i32_174 dim 0 : vector<8x32xf32>, i32 -> vector<8x32xf32>
    %c1_i32_175 = arith.constant 1 : i32
    %335 = vector.broadcast %c1_i32_175 : i32 to vector<8x1xi32>
    %336 = arith.cmpi slt, %274, %335 : vector<8x1xi32>
    %cst_176 = arith.constant 0.000000e+00 : f32
    %337 = vector.shape_cast %336 : vector<8x1xi1> to vector<8x1xi1>
    %338 = vector.broadcast %337 : vector<8x1xi1> to vector<8x32xi1>
    %339 = vector.broadcast %cst_176 : f32 to vector<8x32xf32>
    %340 = arith.select %338, %339, %334 : vector<8x32xi1>, vector<8x32xf32>
    %c0_177 = arith.constant 0 : index
    %c0_178 = arith.constant 0 : index
    %c0_179 = arith.constant 0 : index
    %c0_180 = arith.constant 0 : index
    %341 = vector.load %arg12[%c0_177, %c0_178, %c0_179, %c0_180] : memref<2x3x32x32xf32, #tpu.memory_space<vmem>>, vector<1x1x32x32xf32>
    %342 = vector.shape_cast %341 : vector<1x1x32x32xf32> to vector<32x32xf32>
    %cst_181 = arith.constant dense<0.000000e+00> : vector<8x32xf32>
    %343 = tpu.matmul %340, %342, %cst_181 {dimension_numbers = #tpu.dot_dimension_numbers<[1], [0], [0], [1], [0, 0, 1, 1], [], []>} : vector<8x32xf32>, vector<32x32xf32>, vector<8x32xf32> -> vector<8x32xf32>
    %344 = vector.broadcast %333 : vector<1x32xf32> to vector<8x32xf32>
    %345 = arith.addf %344, %343 : vector<8x32xf32>
    %c0_182 = arith.constant 0 : index
    %c1_183 = arith.constant 1 : index
    %c0_184 = arith.constant 0 : index
    %c0_185 = arith.constant 0 : index
    %346 = vector.load %arg12[%c0_182, %c1_183, %c0_184, %c0_185] : memref<2x3x32x32xf32, #tpu.memory_space<vmem>>, vector<1x1x32x32xf32>
    %347 = vector.shape_cast %346 : vector<1x1x32x32xf32> to vector<32x32xf32>
    %cst_186 = arith.constant dense<0.000000e+00> : vector<8x32xf32>
    %348 = tpu.matmul %331, %347, %cst_186 {dimension_numbers = #tpu.dot_dimension_numbers<[1], [0], [0], [1], [0, 0, 1, 1], [], []>} : vector<8x32xf32>, vector<32x32xf32>, vector<8x32xf32> -> vector<8x32xf32>
    %349 = arith.addf %345, %348 : vector<8x32xf32>
    %c7_i32_187 = arith.constant 7 : i32
    %350 = tpu.dynamic_rotate %331 by %c7_i32_187 dim 0 : vector<8x32xf32>, i32 -> vector<8x32xf32>
    %c7_i32_188 = arith.constant 7 : i32
    %351 = vector.broadcast %c7_i32_188 : i32 to vector<8x1xi32>
    %352 = arith.cmpi sge, %274, %351 : vector<8x1xi32>
    %cst_189 = arith.constant 0.000000e+00 : f32
    %353 = vector.shape_cast %352 : vector<8x1xi1> to vector<8x1xi1>
    %354 = vector.broadcast %353 : vector<8x1xi1> to vector<8x32xi1>
    %355 = vector.broadcast %cst_189 : f32 to vector<8x32xf32>
    %356 = arith.select %354, %355, %350 : vector<8x32xi1>, vector<8x32xf32>
    %c0_190 = arith.constant 0 : index
    %c2_191 = arith.constant 2 : index
    %c0_192 = arith.constant 0 : index
    %c0_193 = arith.constant 0 : index
    %357 = vector.load %arg12[%c0_190, %c2_191, %c0_192, %c0_193] : memref<2x3x32x32xf32, #tpu.memory_space<vmem>>, vector<1x1x32x32xf32>
    %358 = vector.shape_cast %357 : vector<1x1x32x32xf32> to vector<32x32xf32>
    %cst_194 = arith.constant dense<0.000000e+00> : vector<8x32xf32>
    %359 = tpu.matmul %356, %358, %cst_194 {dimension_numbers = #tpu.dot_dimension_numbers<[1], [0], [0], [1], [0, 0, 1, 1], [], []>} : vector<8x32xf32>, vector<32x32xf32>, vector<8x32xf32> -> vector<8x32xf32>
    %360 = arith.addf %349, %359 : vector<8x32xf32>
    %cst_195 = arith.constant 0.000000e+00 : f32
    %361 = vector.broadcast %cst_195 : f32 to vector<8x32xf32>
    %362 = arith.maximumf %360, %361 : vector<8x32xf32>
    %c0_196 = arith.constant 0 : index
    %c4_197 = arith.constant 4 : index
    %c0_198 = arith.constant 0 : index
    %363 = vector.load %arg13[%c0_196, %c4_197, %c0_198] : memref<2x8x32xf32, #tpu.memory_space<vmem>>, vector<1x1x32xf32>
    %364 = vector.shape_cast %363 : vector<1x1x32xf32> to vector<1x32xf32>
    %c0_199 = arith.constant 0 : index
    %c5_200 = arith.constant 5 : index
    %c0_201 = arith.constant 0 : index
    %365 = vector.load %arg13[%c0_199, %c5_200, %c0_201] : memref<2x8x32xf32, #tpu.memory_space<vmem>>, vector<1x1x32xf32>
    %366 = vector.shape_cast %365 : vector<1x1x32xf32> to vector<1x32xf32>
    %cst_202 = arith.constant dense<0.000000e+00> : vector<8xf32>
    %367 = vector.multi_reduction <add>, %362, %cst_202 [1] : vector<8x32xf32> to vector<8xf32>
    %368 = vector.shape_cast %367 : vector<8xf32> to vector<8x1xf32>
    %cst_203 = arith.constant 3.200000e+01 : f32
    %369 = vector.broadcast %cst_203 : f32 to vector<8x1xf32>
    %370 = arith.divf %368, %369 : vector<8x1xf32>
    %371 = vector.broadcast %370 : vector<8x1xf32> to vector<8x32xf32>
    %372 = arith.subf %362, %371 : vector<8x32xf32>
    %373 = arith.mulf %372, %372 : vector<8x32xf32>
    %cst_204 = arith.constant dense<0.000000e+00> : vector<8xf32>
    %374 = vector.multi_reduction <add>, %373, %cst_204 [1] : vector<8x32xf32> to vector<8xf32>
    %375 = vector.shape_cast %374 : vector<8xf32> to vector<8x1xf32>
    %cst_205 = arith.constant 3.200000e+01 : f32
    %376 = vector.broadcast %cst_205 : f32 to vector<8x1xf32>
    %377 = arith.divf %375, %376 : vector<8x1xf32>
    %378 = vector.broadcast %370 : vector<8x1xf32> to vector<8x32xf32>
    %379 = arith.subf %362, %378 : vector<8x32xf32>
    %cst_206 = arith.constant 9.99999974E-6 : f32
    %380 = vector.broadcast %cst_206 : f32 to vector<8x1xf32>
    %381 = arith.addf %377, %380 : vector<8x1xf32>
    %382 = math.rsqrt %381 : vector<8x1xf32>
    %383 = vector.broadcast %382 : vector<8x1xf32> to vector<8x32xf32>
    %384 = arith.mulf %379, %383 : vector<8x32xf32>
    %385 = vector.broadcast %364 : vector<1x32xf32> to vector<8x32xf32>
    %386 = arith.mulf %384, %385 : vector<8x32xf32>
    %387 = vector.broadcast %366 : vector<1x32xf32> to vector<8x32xf32>
    %388 = arith.addf %386, %387 : vector<8x32xf32>
    %c0_207 = arith.constant 0 : index
    %c6 = arith.constant 6 : index
    %c0_208 = arith.constant 0 : index
    %389 = vector.load %arg13[%c0_207, %c6, %c0_208] : memref<2x8x32xf32, #tpu.memory_space<vmem>>, vector<1x1x32xf32>
    %390 = vector.shape_cast %389 : vector<1x1x32xf32> to vector<1x32xf32>
    %cst_209 = arith.constant dense<0.000000e+00> : vector<1x8xf32>
    %391 = tpu.matmul %390, %388, %cst_209 {dimension_numbers = #tpu.dot_dimension_numbers<[1], [1], [0], [0], [0, 0, 1, 0], [], []>} : vector<1x32xf32>, vector<8x32xf32>, vector<1x8xf32> -> vector<1x8xf32>
    %c0_210 = arith.constant 0 : index
    %c7 = arith.constant 7 : index
    %c0_211 = arith.constant 0 : index
    %392 = vector.load %arg13[%c0_210, %c7, %c0_211] : memref<2x8x32xf32, #tpu.memory_space<vmem>>, vector<1x1x1xf32>
    %393 = vector.shape_cast %392 : vector<1x1x1xf32> to vector<1x1xf32>
    %394 = vector.broadcast %393 : vector<1x1xf32> to vector<1x8xf32>
    %395 = arith.addf %391, %394 : vector<1x8xf32>
    %c0_212 = arith.constant 0 : index
    %c0_213 = arith.constant 0 : index
    %c0_214 = arith.constant 0 : index
    %396 = vector.load %arg14[%c0_212, %c0_213, %c0_214] : memref<1x2x8xf32, #tpu.memory_space<vmem>>, vector<1x1x8xf32>
    %397 = vector.shape_cast %396 : vector<1x1x8xf32> to vector<1x8xf32>
    %398 = vector.shape_cast %395 : vector<1x8xf32> to vector<1x1x8xf32>
    tpu.vector_store %arg14[%c0_212, %c0_213, %c0_214], %398 {strides = array<i32>} : memref<1x2x8xf32, #tpu.memory_space<vmem>>, vector<1x1x8xf32>,
    %c1_215 = arith.constant 1 : index
    %c0_216 = arith.constant 0 : index
    %c0_217 = arith.constant 0 : index
    %399 = vector.load %arg13[%c1_215, %c0_216, %c0_217] : memref<2x8x32xf32, #tpu.memory_space<vmem>>, vector<1x1x32xf32>
    %400 = vector.shape_cast %399 : vector<1x1x32xf32> to vector<1x32xf32>
    %c1_i32_218 = arith.constant 1 : i32
    %401 = tpu.dynamic_rotate %273 by %c1_i32_218 dim 0 : vector<8x32xf32>, i32 -> vector<8x32xf32>
    %c1_i32_219 = arith.constant 1 : i32
    %402 = vector.broadcast %c1_i32_219 : i32 to vector<8x1xi32>
    %403 = arith.cmpi slt, %274, %402 : vector<8x1xi32>
    %cst_220 = arith.constant 0.000000e+00 : f32
    %404 = vector.shape_cast %403 : vector<8x1xi1> to vector<8x1xi1>
    %405 = vector.broadcast %404 : vector<8x1xi1> to vector<8x32xi1>
    %406 = vector.broadcast %cst_220 : f32 to vector<8x32xf32>
    %407 = arith.select %405, %406, %401 : vector<8x32xi1>, vector<8x32xf32>
    %c1_221 = arith.constant 1 : index
    %c0_222 = arith.constant 0 : index
    %c0_223 = arith.constant 0 : index
    %c0_224 = arith.constant 0 : index
    %408 = vector.load %arg11[%c1_221, %c0_222, %c0_223, %c0_224] : memref<2x3x32x32xf32, #tpu.memory_space<vmem>>, vector<1x1x32x32xf32>
    %409 = vector.shape_cast %408 : vector<1x1x32x32xf32> to vector<32x32xf32>
    %cst_225 = arith.constant dense<0.000000e+00> : vector<8x32xf32>
    %410 = tpu.matmul %407, %409, %cst_225 {dimension_numbers = #tpu.dot_dimension_numbers<[1], [0], [0], [1], [0, 0, 1, 1], [], []>} : vector<8x32xf32>, vector<32x32xf32>, vector<8x32xf32> -> vector<8x32xf32>
    %411 = vector.broadcast %400 : vector<1x32xf32> to vector<8x32xf32>
    %412 = arith.addf %411, %410 : vector<8x32xf32>
    %c1_226 = arith.constant 1 : index
    %c1_227 = arith.constant 1 : index
    %c0_228 = arith.constant 0 : index
    %c0_229 = arith.constant 0 : index
    %413 = vector.load %arg11[%c1_226, %c1_227, %c0_228, %c0_229] : memref<2x3x32x32xf32, #tpu.memory_space<vmem>>, vector<1x1x32x32xf32>
    %414 = vector.shape_cast %413 : vector<1x1x32x32xf32> to vector<32x32xf32>
    %cst_230 = arith.constant dense<0.000000e+00> : vector<8x32xf32>
    %415 = tpu.matmul %273, %414, %cst_230 {dimension_numbers = #tpu.dot_dimension_numbers<[1], [0], [0], [1], [0, 0, 1, 1], [], []>} : vector<8x32xf32>, vector<32x32xf32>, vector<8x32xf32> -> vector<8x32xf32>
    %416 = arith.addf %412, %415 : vector<8x32xf32>
    %c7_i32_231 = arith.constant 7 : i32
    %417 = tpu.dynamic_rotate %273 by %c7_i32_231 dim 0 : vector<8x32xf32>, i32 -> vector<8x32xf32>
    %c7_i32_232 = arith.constant 7 : i32
    %418 = vector.broadcast %c7_i32_232 : i32 to vector<8x1xi32>
    %419 = arith.cmpi sge, %274, %418 : vector<8x1xi32>
    %cst_233 = arith.constant 0.000000e+00 : f32
    %420 = vector.shape_cast %419 : vector<8x1xi1> to vector<8x1xi1>
    %421 = vector.broadcast %420 : vector<8x1xi1> to vector<8x32xi1>
    %422 = vector.broadcast %cst_233 : f32 to vector<8x32xf32>
    %423 = arith.select %421, %422, %417 : vector<8x32xi1>, vector<8x32xf32>
    %c1_234 = arith.constant 1 : index
    %c2_235 = arith.constant 2 : index
    %c0_236 = arith.constant 0 : index
    %c0_237 = arith.constant 0 : index
    %424 = vector.load %arg11[%c1_234, %c2_235, %c0_236, %c0_237] : memref<2x3x32x32xf32, #tpu.memory_space<vmem>>, vector<1x1x32x32xf32>
    %425 = vector.shape_cast %424 : vector<1x1x32x32xf32> to vector<32x32xf32>
    %cst_238 = arith.constant dense<0.000000e+00> : vector<8x32xf32>
    %426 = tpu.matmul %423, %425, %cst_238 {dimension_numbers = #tpu.dot_dimension_numbers<[1], [0], [0], [1], [0, 0, 1, 1], [], []>} : vector<8x32xf32>, vector<32x32xf32>, vector<8x32xf32> -> vector<8x32xf32>
    %427 = arith.addf %416, %426 : vector<8x32xf32>
    %cst_239 = arith.constant 0.000000e+00 : f32
    %428 = vector.broadcast %cst_239 : f32 to vector<8x32xf32>
    %429 = arith.maximumf %427, %428 : vector<8x32xf32>
    %c1_240 = arith.constant 1 : index
    %c1_241 = arith.constant 1 : index
    %c0_242 = arith.constant 0 : index
    %430 = vector.load %arg13[%c1_240, %c1_241, %c0_242] : memref<2x8x32xf32, #tpu.memory_space<vmem>>, vector<1x1x32xf32>
    %431 = vector.shape_cast %430 : vector<1x1x32xf32> to vector<1x32xf32>
    %c1_243 = arith.constant 1 : index
    %c2_244 = arith.constant 2 : index
    %c0_245 = arith.constant 0 : index
    %432 = vector.load %arg13[%c1_243, %c2_244, %c0_245] : memref<2x8x32xf32, #tpu.memory_space<vmem>>, vector<1x1x32xf32>
    %433 = vector.shape_cast %432 : vector<1x1x32xf32> to vector<1x32xf32>
    %cst_246 = arith.constant dense<0.000000e+00> : vector<8xf32>
    %434 = vector.multi_reduction <add>, %429, %cst_246 [1] : vector<8x32xf32> to vector<8xf32>
    %435 = vector.shape_cast %434 : vector<8xf32> to vector<8x1xf32>
    %cst_247 = arith.constant 3.200000e+01 : f32
    %436 = vector.broadcast %cst_247 : f32 to vector<8x1xf32>
    %437 = arith.divf %435, %436 : vector<8x1xf32>
    %438 = vector.broadcast %437 : vector<8x1xf32> to vector<8x32xf32>
    %439 = arith.subf %429, %438 : vector<8x32xf32>
    %440 = arith.mulf %439, %439 : vector<8x32xf32>
    %cst_248 = arith.constant dense<0.000000e+00> : vector<8xf32>
    %441 = vector.multi_reduction <add>, %440, %cst_248 [1] : vector<8x32xf32> to vector<8xf32>
    %442 = vector.shape_cast %441 : vector<8xf32> to vector<8x1xf32>
    %cst_249 = arith.constant 3.200000e+01 : f32
    %443 = vector.broadcast %cst_249 : f32 to vector<8x1xf32>
    %444 = arith.divf %442, %443 : vector<8x1xf32>
    %445 = vector.broadcast %437 : vector<8x1xf32> to vector<8x32xf32>
    %446 = arith.subf %429, %445 : vector<8x32xf32>
    %cst_250 = arith.constant 9.99999974E-6 : f32
    %447 = vector.broadcast %cst_250 : f32 to vector<8x1xf32>
    %448 = arith.addf %444, %447 : vector<8x1xf32>
    %449 = math.rsqrt %448 : vector<8x1xf32>
    %450 = vector.broadcast %449 : vector<8x1xf32> to vector<8x32xf32>
    %451 = arith.mulf %446, %450 : vector<8x32xf32>
    %452 = vector.broadcast %431 : vector<1x32xf32> to vector<8x32xf32>
    %453 = arith.mulf %451, %452 : vector<8x32xf32>
    %454 = vector.broadcast %433 : vector<1x32xf32> to vector<8x32xf32>
    %455 = arith.addf %453, %454 : vector<8x32xf32>
    %c1_251 = arith.constant 1 : index
    %c3_252 = arith.constant 3 : index
    %c0_253 = arith.constant 0 : index
    %456 = vector.load %arg13[%c1_251, %c3_252, %c0_253] : memref<2x8x32xf32, #tpu.memory_space<vmem>>, vector<1x1x32xf32>
    %457 = vector.shape_cast %456 : vector<1x1x32xf32> to vector<1x32xf32>
    %c1_i32_254 = arith.constant 1 : i32
    %458 = tpu.dynamic_rotate %455 by %c1_i32_254 dim 0 : vector<8x32xf32>, i32 -> vector<8x32xf32>
    %c1_i32_255 = arith.constant 1 : i32
    %459 = vector.broadcast %c1_i32_255 : i32 to vector<8x1xi32>
    %460 = arith.cmpi slt, %274, %459 : vector<8x1xi32>
    %cst_256 = arith.constant 0.000000e+00 : f32
    %461 = vector.shape_cast %460 : vector<8x1xi1> to vector<8x1xi1>
    %462 = vector.broadcast %461 : vector<8x1xi1> to vector<8x32xi1>
    %463 = vector.broadcast %cst_256 : f32 to vector<8x32xf32>
    %464 = arith.select %462, %463, %458 : vector<8x32xi1>, vector<8x32xf32>
    %c1_257 = arith.constant 1 : index
    %c0_258 = arith.constant 0 : index
    %c0_259 = arith.constant 0 : index
    %c0_260 = arith.constant 0 : index
    %465 = vector.load %arg12[%c1_257, %c0_258, %c0_259, %c0_260] : memref<2x3x32x32xf32, #tpu.memory_space<vmem>>, vector<1x1x32x32xf32>
    %466 = vector.shape_cast %465 : vector<1x1x32x32xf32> to vector<32x32xf32>
    %cst_261 = arith.constant dense<0.000000e+00> : vector<8x32xf32>
    %467 = tpu.matmul %464, %466, %cst_261 {dimension_numbers = #tpu.dot_dimension_numbers<[1], [0], [0], [1], [0, 0, 1, 1], [], []>} : vector<8x32xf32>, vector<32x32xf32>, vector<8x32xf32> -> vector<8x32xf32>
    %468 = vector.broadcast %457 : vector<1x32xf32> to vector<8x32xf32>
    %469 = arith.addf %468, %467 : vector<8x32xf32>
    %c1_262 = arith.constant 1 : index
    %c1_263 = arith.constant 1 : index
    %c0_264 = arith.constant 0 : index
    %c0_265 = arith.constant 0 : index
    %470 = vector.load %arg12[%c1_262, %c1_263, %c0_264, %c0_265] : memref<2x3x32x32xf32, #tpu.memory_space<vmem>>, vector<1x1x32x32xf32>
    %471 = vector.shape_cast %470 : vector<1x1x32x32xf32> to vector<32x32xf32>
    %cst_266 = arith.constant dense<0.000000e+00> : vector<8x32xf32>
    %472 = tpu.matmul %455, %471, %cst_266 {dimension_numbers = #tpu.dot_dimension_numbers<[1], [0], [0], [1], [0, 0, 1, 1], [], []>} : vector<8x32xf32>, vector<32x32xf32>, vector<8x32xf32> -> vector<8x32xf32>
    %473 = arith.addf %469, %472 : vector<8x32xf32>
    %c7_i32_267 = arith.constant 7 : i32
    %474 = tpu.dynamic_rotate %455 by %c7_i32_267 dim 0 : vector<8x32xf32>, i32 -> vector<8x32xf32>
    %c7_i32_268 = arith.constant 7 : i32
    %475 = vector.broadcast %c7_i32_268 : i32 to vector<8x1xi32>
    %476 = arith.cmpi sge, %274, %475 : vector<8x1xi32>
    %cst_269 = arith.constant 0.000000e+00 : f32
    %477 = vector.shape_cast %476 : vector<8x1xi1> to vector<8x1xi1>
    %478 = vector.broadcast %477 : vector<8x1xi1> to vector<8x32xi1>
    %479 = vector.broadcast %cst_269 : f32 to vector<8x32xf32>
    %480 = arith.select %478, %479, %474 : vector<8x32xi1>, vector<8x32xf32>
    %c1_270 = arith.constant 1 : index
    %c2_271 = arith.constant 2 : index
    %c0_272 = arith.constant 0 : index
    %c0_273 = arith.constant 0 : index
    %481 = vector.load %arg12[%c1_270, %c2_271, %c0_272, %c0_273] : memref<2x3x32x32xf32, #tpu.memory_space<vmem>>, vector<1x1x32x32xf32>
    %482 = vector.shape_cast %481 : vector<1x1x32x32xf32> to vector<32x32xf32>
    %cst_274 = arith.constant dense<0.000000e+00> : vector<8x32xf32>
    %483 = tpu.matmul %480, %482, %cst_274 {dimension_numbers = #tpu.dot_dimension_numbers<[1], [0], [0], [1], [0, 0, 1, 1], [], []>} : vector<8x32xf32>, vector<32x32xf32>, vector<8x32xf32> -> vector<8x32xf32>
    %484 = arith.addf %473, %483 : vector<8x32xf32>
    %cst_275 = arith.constant 0.000000e+00 : f32
    %485 = vector.broadcast %cst_275 : f32 to vector<8x32xf32>
    %486 = arith.maximumf %484, %485 : vector<8x32xf32>
    %c1_276 = arith.constant 1 : index
    %c4_277 = arith.constant 4 : index
    %c0_278 = arith.constant 0 : index
    %487 = vector.load %arg13[%c1_276, %c4_277, %c0_278] : memref<2x8x32xf32, #tpu.memory_space<vmem>>, vector<1x1x32xf32>
    %488 = vector.shape_cast %487 : vector<1x1x32xf32> to vector<1x32xf32>
    %c1_279 = arith.constant 1 : index
    %c5_280 = arith.constant 5 : index
    %c0_281 = arith.constant 0 : index
    %489 = vector.load %arg13[%c1_279, %c5_280, %c0_281] : memref<2x8x32xf32, #tpu.memory_space<vmem>>, vector<1x1x32xf32>
    %490 = vector.shape_cast %489 : vector<1x1x32xf32> to vector<1x32xf32>
    %cst_282 = arith.constant dense<0.000000e+00> : vector<8xf32>
    %491 = vector.multi_reduction <add>, %486, %cst_282 [1] : vector<8x32xf32> to vector<8xf32>
    %492 = vector.shape_cast %491 : vector<8xf32> to vector<8x1xf32>
    %cst_283 = arith.constant 3.200000e+01 : f32
    %493 = vector.broadcast %cst_283 : f32 to vector<8x1xf32>
    %494 = arith.divf %492, %493 : vector<8x1xf32>
    %495 = vector.broadcast %494 : vector<8x1xf32> to vector<8x32xf32>
    %496 = arith.subf %486, %495 : vector<8x32xf32>
    %497 = arith.mulf %496, %496 : vector<8x32xf32>
    %cst_284 = arith.constant dense<0.000000e+00> : vector<8xf32>
    %498 = vector.multi_reduction <add>, %497, %cst_284 [1] : vector<8x32xf32> to vector<8xf32>
    %499 = vector.shape_cast %498 : vector<8xf32> to vector<8x1xf32>
    %cst_285 = arith.constant 3.200000e+01 : f32
    %500 = vector.broadcast %cst_285 : f32 to vector<8x1xf32>
    %501 = arith.divf %499, %500 : vector<8x1xf32>
    %502 = vector.broadcast %494 : vector<8x1xf32> to vector<8x32xf32>
    %503 = arith.subf %486, %502 : vector<8x32xf32>
    %cst_286 = arith.constant 9.99999974E-6 : f32
    %504 = vector.broadcast %cst_286 : f32 to vector<8x1xf32>
    %505 = arith.addf %501, %504 : vector<8x1xf32>
    %506 = math.rsqrt %505 : vector<8x1xf32>
    %507 = vector.broadcast %506 : vector<8x1xf32> to vector<8x32xf32>
    %508 = arith.mulf %503, %507 : vector<8x32xf32>
    %509 = vector.broadcast %488 : vector<1x32xf32> to vector<8x32xf32>
    %510 = arith.mulf %508, %509 : vector<8x32xf32>
    %511 = vector.broadcast %490 : vector<1x32xf32> to vector<8x32xf32>
    %512 = arith.addf %510, %511 : vector<8x32xf32>
    %c1_287 = arith.constant 1 : index
    %c6_288 = arith.constant 6 : index
    %c0_289 = arith.constant 0 : index
    %513 = vector.load %arg13[%c1_287, %c6_288, %c0_289] : memref<2x8x32xf32, #tpu.memory_space<vmem>>, vector<1x1x32xf32>
    %514 = vector.shape_cast %513 : vector<1x1x32xf32> to vector<1x32xf32>
    %cst_290 = arith.constant dense<0.000000e+00> : vector<1x8xf32>
    %515 = tpu.matmul %514, %512, %cst_290 {dimension_numbers = #tpu.dot_dimension_numbers<[1], [1], [0], [0], [0, 0, 1, 0], [], []>} : vector<1x32xf32>, vector<8x32xf32>, vector<1x8xf32> -> vector<1x8xf32>
    %c1_291 = arith.constant 1 : index
    %c7_292 = arith.constant 7 : index
    %c0_293 = arith.constant 0 : index
    %516 = vector.load %arg13[%c1_291, %c7_292, %c0_293] : memref<2x8x32xf32, #tpu.memory_space<vmem>>, vector<1x1x1xf32>
    %517 = vector.shape_cast %516 : vector<1x1x1xf32> to vector<1x1xf32>
    %518 = vector.broadcast %517 : vector<1x1xf32> to vector<1x8xf32>
    %519 = arith.addf %515, %518 : vector<1x8xf32>
    %c0_294 = arith.constant 0 : index
    %c1_295 = arith.constant 1 : index
    %c0_296 = arith.constant 0 : index
    %520 = vector.load %arg14[%c0_294, %c1_295, %c0_296] : memref<1x2x8xf32, #tpu.memory_space<vmem>>, vector<1x1x8xf32>
    %521 = vector.shape_cast %520 : vector<1x1x8xf32> to vector<1x8xf32>
    %522 = vector.shape_cast %519 : vector<1x8xf32> to vector<1x1x8xf32>
    tpu.vector_store %arg14[%c0_294, %c1_295, %c0_296], %522 {strides = array<i32>} : memref<1x2x8xf32, #tpu.memory_space<vmem>>, vector<1x1x8xf32>,
    return
  }
  func.func @transform_0(%arg0: i32) -> (i32, i32, i32) {
    %c0_i32 = arith.constant 0 : i32
    %c0_i32_0 = arith.constant 0 : i32
    %c0_i32_1 = arith.constant 0 : i32
    return %arg0, %c0_i32, %c0_i32_0 : i32, i32, i32
  }
  func.func @transform_1(%arg0: i32) -> (i32, i32, i32) {
    %c0_i32 = arith.constant 0 : i32
    %c0_i32_0 = arith.constant 0 : i32
    %c0_i32_1 = arith.constant 0 : i32
    return %arg0, %c0_i32, %c0_i32_0 : i32, i32, i32
  }
  func.func @transform_2(%arg0: i32) -> (i32, i32, i32) {
    %c0_i32 = arith.constant 0 : i32
    %c0_i32_0 = arith.constant 0 : i32
    %c0_i32_1 = arith.constant 0 : i32
    %c0_i32_2 = arith.constant 0 : i32
    return %c0_i32, %c0_i32_0, %c0_i32_1 : i32, i32, i32
  }
  func.func @transform_3(%arg0: i32) -> (i32, i32, i32) {
    %c0_i32 = arith.constant 0 : i32
    %c0_i32_0 = arith.constant 0 : i32
    %c0_i32_1 = arith.constant 0 : i32
    %c0_i32_2 = arith.constant 0 : i32
    return %c0_i32, %c0_i32_0, %c0_i32_1 : i32, i32, i32
  }
  func.func @transform_4(%arg0: i32) -> (i32, i32, i32) {
    %c0_i32 = arith.constant 0 : i32
    %c0_i32_0 = arith.constant 0 : i32
    %c0_i32_1 = arith.constant 0 : i32
    %c0_i32_2 = arith.constant 0 : i32
    return %c0_i32, %c0_i32_0, %c0_i32_1 : i32, i32, i32
  }
  func.func @transform_5(%arg0: i32) -> (i32, i32, i32) {
    %c0_i32 = arith.constant 0 : i32
    %c0_i32_0 = arith.constant 0 : i32
    %c0_i32_1 = arith.constant 0 : i32
    %c0_i32_2 = arith.constant 0 : i32
    return %c0_i32, %c0_i32_0, %c0_i32_1 : i32, i32, i32
  }
  func.func @transform_6(%arg0: i32) -> (i32, i32, i32) {
    %c0_i32 = arith.constant 0 : i32
    %c0_i32_0 = arith.constant 0 : i32
    %c0_i32_1 = arith.constant 0 : i32
    %c0_i32_2 = arith.constant 0 : i32
    return %c0_i32, %c0_i32_0, %c0_i32_1 : i32, i32, i32
  }
  func.func @transform_7(%arg0: i32) -> (i32, i32, i32) {
    %c0_i32 = arith.constant 0 : i32
    %c0_i32_0 = arith.constant 0 : i32
    %c0_i32_1 = arith.constant 0 : i32
    %c0_i32_2 = arith.constant 0 : i32
    return %c0_i32, %c0_i32_0, %c0_i32_1 : i32, i32, i32
  }
  func.func @transform_8(%arg0: i32) -> (i32, i32, i32) {
    %c0_i32 = arith.constant 0 : i32
    %c0_i32_0 = arith.constant 0 : i32
    %c0_i32_1 = arith.constant 0 : i32
    %c0_i32_2 = arith.constant 0 : i32
    return %c0_i32, %c0_i32_0, %c0_i32_1 : i32, i32, i32
  }
  func.func @transform_9(%arg0: i32) -> (i32, i32) {
    %c0_i32 = arith.constant 0 : i32
    %c0_i32_0 = arith.constant 0 : i32
    %c0_i32_1 = arith.constant 0 : i32
    return %c0_i32, %c0_i32_0 : i32, i32
  }
  func.func @transform_10(%arg0: i32) -> (i32, i32, i32, i32) {
    %c0_i32 = arith.constant 0 : i32
    %c0_i32_0 = arith.constant 0 : i32
    %c0_i32_1 = arith.constant 0 : i32
    %c0_i32_2 = arith.constant 0 : i32
    %c0_i32_3 = arith.constant 0 : i32
    return %c0_i32, %c0_i32_0, %c0_i32_1, %c0_i32_2 : i32, i32, i32, i32
  }
  func.func @transform_11(%arg0: i32) -> (i32, i32, i32, i32) {
    %c0_i32 = arith.constant 0 : i32
    %c0_i32_0 = arith.constant 0 : i32
    %c0_i32_1 = arith.constant 0 : i32
    %c0_i32_2 = arith.constant 0 : i32
    %c0_i32_3 = arith.constant 0 : i32
    return %c0_i32, %c0_i32_0, %c0_i32_1, %c0_i32_2 : i32, i32, i32, i32
  }
  func.func @transform_12(%arg0: i32) -> (i32, i32, i32) {
    %c0_i32 = arith.constant 0 : i32
    %c0_i32_0 = arith.constant 0 : i32
    %c0_i32_1 = arith.constant 0 : i32
    %c0_i32_2 = arith.constant 0 : i32
    return %c0_i32, %c0_i32_0, %c0_i32_1 : i32, i32, i32
  }
  func.func @transform_13(%arg0: i32) -> (i32, i32, i32) {
    %c0_i32 = arith.constant 0 : i32
    %c0_i32_0 = arith.constant 0 : i32
    %c0_i32_1 = arith.constant 0 : i32
    return %arg0, %c0_i32, %c0_i32_0 : i32, i32, i32
  }
}

</mosaic_0001>

<llo_original>
// kernel: pitch_and_duration_predictor.1
$region0: #{pitch_and_duration_predictor.1}
  #allocation0 [shape = 'u32[]', space=smem, size = 0x4, offset = 0x4, fixed_abs, tag = 'smem constant byte address 0x4 - core index']
  #allocation1 [shape = 'u32[72,128]{1,0:T(1,128)}', space=vmem, size = 0x9000, scoped, tag = 'internal scratch']
  %s0 = inlined_call_operand.vmem [shape: f32[2,8,32], index: 0, kind: input, shape index: {}]
  %s1 = inlined_call_operand.vmem [shape: f32[2,1,32], index: 1, kind: input, shape index: {}]
  %s2 = inlined_call_operand.vmem [shape: f32[2,6,32], index: 2, kind: input, shape index: {}]
  %s3 = inlined_call_operand.vmem [shape: f32[2,32,96], index: 3, kind: input, shape index: {}]
  %s4 = inlined_call_operand.vmem [shape: f32[2,1,96], index: 4, kind: input, shape index: {}]
  %s5 = inlined_call_operand.vmem [shape: f32[2,32,32], index: 5, kind: input, shape index: {}]
  %s6 = inlined_call_operand.hbm [shape: f32[2,32,64], index: 6, kind: input, shape index: {}]
  %s7 = inlined_call_operand.vmem [shape: f32[2,1,64], index: 7, kind: input, shape index: {}]
  %s8 = inlined_call_operand.vmem [shape: f32[2,64,32], index: 8, kind: input, shape index: {}]
  %s9 = inlined_call_operand.vmem [shape: f32[2,32], index: 9, kind: input, shape index: {}]
  %s10 = inlined_call_operand.vmem [shape: f32[2,3,32,32], index: 10, kind: input, shape index: {}]
  %s11 = inlined_call_operand.vmem [shape: f32[2,3,32,32], index: 11, kind: input, shape index: {}]
  %s12 = inlined_call_operand.vmem [shape: f32[2,8,32], index: 12, kind: input, shape index: {}]
  %s13 = inlined_call_operand.vmem [shape: f32[2,2,8], index: 13, kind: output, shape index: {}]
  %s14 = sld [smem:[#allocation0]]
  $region89: #{pitch_and_duration_predictor.1} parent=0
    _
  %s16 = ssub.s32 1, %s14
  %s17 = scalar_select 0, %s16, %s14
  $region1: #{pitch_and_duration_predictor.1} parent=0
    #allocation2 [shape = 'u8[32768]{0}', space=vmem, size = 0x8000, scoped, tag = 'input window, operand 6, single buffered']
    #allocation3 [shape = 's32[2]{0}', space=sflag, size = 0x8, scoped, tag = 'scoped memory for pitch_and_duration_predictor.1']
    %18 = vsyncpa [#allocation3], 0
    loop: start=0, step=1, limit=4
    $region2: #{pitch_and_duration_predictor.1} parent=1 // loop_pre_header
      _
    $region3: #{pitch_and_duration_predictor.1} parent=1 // loop_header
      %s20 = sphi 0, %s24
      %p21 = scmp.ge.s32.totalorder %s20, 4
      %s30 = sphi 0, %s32
      %s33 = sphi 0, %s30
      %s34 = sphi 0, %s33
      %s50 = sphi 0, %s34
      %s56 = sphi 0, %s58
      %s59 = sphi 0, %s56
      %s60 = sphi 0, %s59
      %s76 = sphi 0, %s60
      %s80 = sphi 0, %s80
      %s82 = sphi 0, %s80
      %s83 = sphi 0, %s82
      %s97 = sphi 0, %s83
      %s101 = sphi 0, %s101
      %s103 = sphi 0, %s101
      %s104 = sphi 0, %s103
      %s118 = sphi 0, %s104
      %s122 = sphi 0, %s122
      %s124 = sphi 0, %s122
      %s125 = sphi 0, %s124
      %s139 = sphi 0, %s125
      %s143 = sphi 0, %s143
      %s145 = sphi 0, %s143
      %s146 = sphi 0, %s145
      %s160 = sphi 0, %s146
      %s164 = sphi 0, %s164
      %s166 = sphi 0, %s164
      %s167 = sphi 0, %s166
      %s181 = sphi 0, %s167
      %s185 = sphi 0, %s185
      %s187 = sphi 0, %s185
      %s188 = sphi 0, %s187
      %s202 = sphi 0, %s188
      %s206 = sphi 0, %s206
      %s208 = sphi 0, %s206
      %s209 = sphi 0, %s208
      %s223 = sphi 0, %s209
      %s227 = sphi 0, %s227
      %s229 = sphi 0, %s227
      %s230 = sphi 0, %s229
      %s244 = sphi 0, %s230
      %s248 = sphi 0, %s248
      %s250 = sphi 0, %s248
      %s251 = sphi 0, %s250
      %s265 = sphi 0, %s251
      %s269 = sphi 0, %s269
      %s271 = sphi 0, %s269
      %s272 = sphi 0, %s271
      %s286 = sphi 0, %s272
      %s290 = sphi 0, %s290
      %s292 = sphi 0, %s290
      %s293 = sphi 0, %s292
      %s307 = sphi 0, %s293
      %s313 = sphi 0, %s315
      %s316 = sphi 0, %s313
      %s317 = sphi 0, %s316
      %s333 = sphi 0, %s317
    $region4: #{pitch_and_duration_predictor.1} parent=1 // loop_header_branch
      %23 = sbr.rel (%p21) target = $region8
    $region5: #{pitch_and_duration_predictor.1} parent=1 // loop_body
      %s25 = ssub.s32 %s20, 1
      %s26 = ssub.s32 %s20, 2
      %s27 = sadd.s32 %s20, 1
      %s28 = ssub.s32 %s20, %s27
      %p29 = scmp.eq.s32.totalorder %s28, 0
      %s31 = sadd.s32 %s30, 1
      %s32 = scalar_select %p29, %s30, %s31
      %p35 = pneg %p29
      %p36 = scmp.eq.s32.totalorder %s20, 1
      %p37 = por %p35, %p36
      %p38 = scmp.ne.s32.totalorder %s30, %s33
      %p39 = scmp.eq.s32.totalorder %s20, 0
      %p40 = por %p38, %p39
      %p41 = scmp.ne.s32.totalorder %s30, %s33
      %p42 = scmp.eq.s32.totalorder %s25, 1
      %p43 = por %p41, %p42
      %p44 = scmp.ne.s32.totalorder %s33, %s34
      %p45 = scmp.eq.s32.totalorder %s25, 0
      %p46 = por %p44, %p45
      %p47 = scmp.ne.s32.totalorder %s33, %s34
      %p48 = scmp.eq.s32.totalorder %s26, 1
      %p49 = por %p47, %p48
      %p51 = scmp.ne.s32.totalorder %s34, %s50
      %p52 = scmp.eq.s32.totalorder %s26, 0
      %p53 = por %p51, %p52
      %s54 = ssub.s32 %s20, %s27
      %p55 = scmp.eq.s32.totalorder %s54, 0
      %s57 = sadd.s32 %s56, 1
      %s58 = scalar_select %p55, %s56, %s57
      %p61 = pneg %p55
      %p62 = scmp.eq.s32.totalorder %s20, 1
      %p63 = por %p61, %p62
      %p64 = scmp.ne.s32.totalorder %s56, %s59
      %p65 = scmp.eq.s32.totalorder %s20, 0
      %p66 = por %p64, %p65
      %p67 = scmp.ne.s32.totalorder %s56, %s59
      %p68 = scmp.eq.s32.totalorder %s25, 1
      %p69 = por %p67, %p68
      %p70 = scmp.ne.s32.totalorder %s59, %s60
      %p71 = scmp.eq.s32.totalorder %s25, 0
      %p72 = por %p70, %p71
      %p73 = scmp.ne.s32.totalorder %s59, %s60
      %p74 = scmp.eq.s32.totalorder %s26, 1
      %p75 = por %p73, %p74
      %p77 = scmp.ne.s32.totalorder %s60, %s76
      %p78 = scmp.eq.s32.totalorder %s26, 0
      %p79 = por %p77, %p78
      %s81 = sadd.s32 %s80, 1
      %p84 = scmp.eq.s32.totalorder %s20, 1
      %p85 = scmp.ne.s32.totalorder %s80, %s82
      %p86 = scmp.eq.s32.totalorder %s20, 0
      %p87 = por %p85, %p86
      %p88 = scmp.ne.s32.totalorder %s80, %s82
      %p89 = scmp.eq.s32.totalorder %s25, 1
      %p90 = por %p88, %p89
      %p91 = scmp.ne.s32.totalorder %s82, %s83
      %p92 = scmp.eq.s32.totalorder %s25, 0
      %p93 = por %p91, %p92
      %p94 = scmp.ne.s32.totalorder %s82, %s83
      %p95 = scmp.eq.s32.totalorder %s26, 1
      %p96 = por %p94, %p95
      %p98 = scmp.ne.s32.totalorder %s83, %s97
      %p99 = scmp.eq.s32.totalorder %s26, 0
      %p100 = por %p98, %p99
      %s102 = sadd.s32 %s101, 1
      %p105 = scmp.eq.s32.totalorder %s20, 1
      %p106 = scmp.ne.s32.totalorder %s101, %s103
      %p107 = scmp.eq.s32.totalorder %s20, 0
      %p108 = por %p106, %p107
      %p109 = scmp.ne.s32.totalorder %s101, %s103
      %p110 = scmp.eq.s32.totalorder %s25, 1
      %p111 = por %p109, %p110
      %p112 = scmp.ne.s32.totalorder %s103, %s104
      %p113 = scmp.eq.s32.totalorder %s25, 0
      %p114 = por %p112, %p113
      %p115 = scmp.ne.s32.totalorder %s103, %s104
      %p116 = scmp.eq.s32.totalorder %s26, 1
      %p117 = por %p115, %p116
      %p119 = scmp.ne.s32.totalorder %s104, %s118
      %p120 = scmp.eq.s32.totalorder %s26, 0
      %p121 = por %p119, %p120
      %s123 = sadd.s32 %s122, 1
      %p126 = scmp.eq.s32.totalorder %s20, 1
      %p127 = scmp.ne.s32.totalorder %s122, %s124
      %p128 = scmp.eq.s32.totalorder %s20, 0
      %p129 = por %p127, %p128
      %p130 = scmp.ne.s32.totalorder %s122, %s124
      %p131 = scmp.eq.s32.totalorder %s25, 1
      %p132 = por %p130, %p131
      %p133 = scmp.ne.s32.totalorder %s124, %s125
      %p134 = scmp.eq.s32.totalorder %s25, 0
      %p135 = por %p133, %p134
      %p136 = scmp.ne.s32.totalorder %s124, %s125
      %p137 = scmp.eq.s32.totalorder %s26, 1
      %p138 = por %p136, %p137
      %p140 = scmp.ne.s32.totalorder %s125, %s139
      %p141 = scmp.eq.s32.totalorder %s26, 0
      %p142 = por %p140, %p141
      %s144 = sadd.s32 %s143, 1
      %p147 = scmp.eq.s32.totalorder %s20, 1
      %p148 = scmp.ne.s32.totalorder %s143, %s145
      %p149 = scmp.eq.s32.totalorder %s20, 0
      %p150 = por %p148, %p149
      %p151 = scmp.ne.s32.totalorder %s143, %s145
      %p152 = scmp.eq.s32.totalorder %s25, 1
      %p153 = por %p151, %p152
      %p154 = scmp.ne.s32.totalorder %s145, %s146
      %p155 = scmp.eq.s32.totalorder %s25, 0
      %p156 = por %p154, %p155
      %p157 = scmp.ne.s32.totalorder %s145, %s146
      %p158 = scmp.eq.s32.totalorder %s26, 1
      %p159 = por %p157, %p158
      %p161 = scmp.ne.s32.totalorder %s146, %s160
      %p162 = scmp.eq.s32.totalorder %s26, 0
      %p163 = por %p161, %p162
      %s165 = sadd.s32 %s164, 1
      %p168 = scmp.eq.s32.totalorder %s20, 1
      %p169 = scmp.ne.s32.totalorder %s164, %s166
      %p170 = scmp.eq.s32.totalorder %s20, 0
      %p171 = por %p169, %p170
      %p172 = scmp.ne.s32.totalorder %s164, %s166
      %p173 = scmp.eq.s32.totalorder %s25, 1
      %p174 = por %p172, %p173
      %p175 = scmp.ne.s32.totalorder %s166, %s167
      %p176 = scmp.eq.s32.totalorder %s25, 0
      %p177 = por %p175, %p176
      %p178 = scmp.ne.s32.totalorder %s166, %s167
      %p179 = scmp.eq.s32.totalorder %s26, 1
      %p180 = por %p178, %p179
      %p182 = scmp.ne.s32.totalorder %s167, %s181
      %p183 = scmp.eq.s32.totalorder %s26, 0
      %p184 = por %p182, %p183
      %s186 = sadd.s32 %s185, 1
      %p189 = scmp.eq.s32.totalorder %s20, 1
      %p190 = scmp.ne.s32.totalorder %s185, %s187
      %p191 = scmp.eq.s32.totalorder %s20, 0
      %p192 = por %p190, %p191
      %p193 = scmp.ne.s32.totalorder %s185, %s187
      %p194 = scmp.eq.s32.totalorder %s25, 1
      %p195 = por %p193, %p194
      %p196 = scmp.ne.s32.totalorder %s187, %s188
      %p197 = scmp.eq.s32.totalorder %s25, 0
      %p198 = por %p196, %p197
      %p199 = scmp.ne.s32.totalorder %s187, %s188
      %p200 = scmp.eq.s32.totalorder %s26, 1
      %p201 = por %p199, %p200
      %p203 = scmp.ne.s32.totalorder %s188, %s202
      %p204 = scmp.eq.s32.totalorder %s26, 0
      %p205 = por %p203, %p204
      %s207 = sadd.s32 %s206, 1
      %p210 = scmp.eq.s32.totalorder %s20, 1
      %p211 = scmp.ne.s32.totalorder %s206, %s208
      %p212 = scmp.eq.s32.totalorder %s20, 0
      %p213 = por %p211, %p212
      %p214 = scmp.ne.s32.totalorder %s206, %s208
      %p215 = scmp.eq.s32.totalorder %s25, 1
      %p216 = por %p214, %p215
      %p217 = scmp.ne.s32.totalorder %s208, %s209
      %p218 = scmp.eq.s32.totalorder %s25, 0
      %p219 = por %p217, %p218
      %p220 = scmp.ne.s32.totalorder %s208, %s209
      %p221 = scmp.eq.s32.totalorder %s26, 1
      %p222 = por %p220, %p221
      %p224 = scmp.ne.s32.totalorder %s209, %s223
      %p225 = scmp.eq.s32.totalorder %s26, 0
      %p226 = por %p224, %p225
      %s228 = sadd.s32 %s227, 1
      %p231 = scmp.eq.s32.totalorder %s20, 1
      %p232 = scmp.ne.s32.totalorder %s227, %s229
      %p233 = scmp.eq.s32.totalorder %s20, 0
      %p234 = por %p232, %p233
      %p235 = scmp.ne.s32.totalorder %s227, %s229
      %p236 = scmp.eq.s32.totalorder %s25, 1
      %p237 = por %p235, %p236
      %p238 = scmp.ne.s32.totalorder %s229, %s230
      %p239 = scmp.eq.s32.totalorder %s25, 0
      %p240 = por %p238, %p239
      %p241 = scmp.ne.s32.totalorder %s229, %s230
      %p242 = scmp.eq.s32.totalorder %s26, 1
      %p243 = por %p241, %p242
      %p245 = scmp.ne.s32.totalorder %s230, %s244
      %p246 = scmp.eq.s32.totalorder %s26, 0
      %p247 = por %p245, %p246
      %s249 = sadd.s32 %s248, 1
      %p252 = scmp.eq.s32.totalorder %s20, 1
      %p253 = scmp.ne.s32.totalorder %s248, %s250
      %p254 = scmp.eq.s32.totalorder %s20, 0
      %p255 = por %p253, %p254
      %p256 = scmp.ne.s32.totalorder %s248, %s250
      %p257 = scmp.eq.s32.totalorder %s25, 1
      %p258 = por %p256, %p257
      %p259 = scmp.ne.s32.totalorder %s250, %s251
      %p260 = scmp.eq.s32.totalorder %s25, 0
      %p261 = por %p259, %p260
      %p262 = scmp.ne.s32.totalorder %s250, %s251
      %p263 = scmp.eq.s32.totalorder %s26, 1
      %p264 = por %p262, %p263
      %p266 = scmp.ne.s32.totalorder %s251, %s265
      %p267 = scmp.eq.s32.totalorder %s26, 0
      %p268 = por %p266, %p267
      %s270 = sadd.s32 %s269, 1
      %p273 = scmp.eq.s32.totalorder %s20, 1
      %p274 = scmp.ne.s32.totalorder %s269, %s271
      %p275 = scmp.eq.s32.totalorder %s20, 0
      %p276 = por %p274, %p275
      %p277 = scmp.ne.s32.totalorder %s269, %s271
      %p278 = scmp.eq.s32.totalorder %s25, 1
      %p279 = por %p277, %p278
      %p280 = scmp.ne.s32.totalorder %s271, %s272
      %p281 = scmp.eq.s32.totalorder %s25, 0
      %p282 = por %p280, %p281
      %p283 = scmp.ne.s32.totalorder %s271, %s272
      %p284 = scmp.eq.s32.totalorder %s26, 1
      %p285 = por %p283, %p284
      %p287 = scmp.ne.s32.totalorder %s272, %s286
      %p288 = scmp.eq.s32.totalorder %s26, 0
      %p289 = por %p287, %p288
      %s291 = sadd.s32 %s290, 1
      %p294 = scmp.eq.s32.totalorder %s20, 1
      %p295 = scmp.ne.s32.totalorder %s290, %s292
      %p296 = scmp.eq.s32.totalorder %s20, 0
      %p297 = por %p295, %p296
      %p298 = scmp.ne.s32.totalorder %s290, %s292
      %p299 = scmp.eq.s32.totalorder %s25, 1
      %p300 = por %p298, %p299
      %p301 = scmp.ne.s32.totalorder %s292, %s293
      %p302 = scmp.eq.s32.totalorder %s25, 0
      %p303 = por %p301, %p302
      %p304 = scmp.ne.s32.totalorder %s292, %s293
      %p305 = scmp.eq.s32.totalorder %s26, 1
      %p306 = por %p304, %p305
      %p308 = scmp.ne.s32.totalorder %s293, %s307
      %p309 = scmp.eq.s32.totalorder %s26, 0
      %p310 = por %p308, %p309
      %s311 = ssub.s32 %s20, %s27
      %p312 = scmp.eq.s32.totalorder %s311, 0
      %s314 = sadd.s32 %s313, 1
      %s315 = scalar_select %p312, %s313, %s314
      %p318 = pneg %p312
      %p319 = scmp.eq.s32.totalorder %s20, 1
      %p320 = por %p318, %p319
      %p321 = scmp.ne.s32.totalorder %s313, %s316
      %p322 = scmp.eq.s32.totalorder %s20, 0
      %p323 = por %p321, %p322
      %p324 = scmp.ne.s32.totalorder %s313, %s316
      %p325 = scmp.eq.s32.totalorder %s25, 1
      %p326 = por %p324, %p325
      %p327 = scmp.ne.s32.totalorder %s316, %s317
      %p328 = scmp.eq.s32.totalorder %s25, 0
      %p329 = por %p327, %p328
      %p330 = scmp.ne.s32.totalorder %s316, %s317
      %p331 = scmp.eq.s32.totalorder %s26, 1
      %p332 = por %p330, %p331
      %p334 = scmp.ne.s32.totalorder %s317, %s333
      %p335 = scmp.eq.s32.totalorder %s26, 0
      %p336 = por %p334, %p335
      %p337 = scmp.le.s32.totalorder 1, %s20
      %p338 = scmp.lt.s32.totalorder %s20, 3
      %p339 = pnand %p337, %p338
      %p340 = pneg %p339
      // Predicated region
      $region9: #{pitch_and_duration_predictor.1} parent=5 // pred_check
        _
      $region10: #{pitch_and_duration_predictor.1} parent=5 // pred_check_branch
        %342 = sbr.rel (%p339) target = $region12
      $region11: #{pitch_and_duration_predictor.1} parent=5 // pred_region
        %s343 = ssub.s32 %s20, 1
        // Predicated region
        $region13: #{pitch_and_duration_predictor.1} parent=11 // pred_check
          %p344 = pneg %p93
        $region14: #{pitch_and_duration_predictor.1} parent=11 // pred_check_branch
          %346 = sbr.rel (%p344) target = $region16
        $region15: #{pitch_and_duration_predictor.1} parent=11 // pred_region
          _
        $region16: #{pitch_and_duration_predictor.1} parent=11 // pred_fallthru
          _
        // Predicated region
        $region17: #{pitch_and_duration_predictor.1} parent=11 // pred_check
          %p347 = pneg %p114
        $region18: #{pitch_and_duration_predictor.1} parent=11 // pred_check_branch
          %349 = sbr.rel (%p347) target = $region20
        $region19: #{pitch_and_duration_predictor.1} parent=11 // pred_region
          _
        $region20: #{pitch_and_duration_predictor.1} parent=11 // pred_fallthru
          _
        // Predicated region
        $region21: #{pitch_and_duration_predictor.1} parent=11 // pred_check
          %p350 = pneg %p135
        $region22: #{pitch_and_duration_predictor.1} parent=11 // pred_check_branch
          %352 = sbr.rel (%p350) target = $region24
        $region23: #{pitch_and_duration_predictor.1} parent=11 // pred_region
          _
        $region24: #{pitch_and_duration_predictor.1} parent=11 // pred_fallthru
          _
        // Predicated region
        $region25: #{pitch_and_duration_predictor.1} parent=11 // pred_check
          %p353 = pneg %p156
        $region26: #{pitch_and_duration_predictor.1} parent=11 // pred_check_branch
          %355 = sbr.rel (%p353) target = $region28
        $region27: #{pitch_and_duration_predictor.1} parent=11 // pred_region
          _
        $region28: #{pitch_and_duration_predictor.1} parent=11 // pred_fallthru
          _
        // Predicated region
        $region29: #{pitch_and_duration_predictor.1} parent=11 // pred_check
          %p356 = pneg %p177
        $region30: #{pitch_and_duration_predictor.1} parent=11 // pred_check_branch
          %358 = sbr.rel (%p356) target = $region32
        $region31: #{pitch_and_duration_predictor.1} parent=11 // pred_region
          %360 = vsyncadd [#allocation3], 0
          %s361 = sshll.u32 %s6, 4
          %s362 = int_to_ptr.hbm [resolvable:$true] %s361
          %s363 = sshll.u32 [#allocation2], 4
          %s364 = int_to_ptr.vmem [resolvable:$true] %s363
          %369 = dma.hbm_to_vmem [thread:$0]  %s362, 1024, %s364, [#allocation3], 128, 128, 8
        $region32: #{pitch_and_duration_predictor.1} parent=11 // pred_fallthru
          _
        // Predicated region
        $region33: #{pitch_and_duration_predictor.1} parent=11 // pred_check
          %p370 = pneg %p198
        $region34: #{pitch_and_duration_predictor.1} parent=11 // pred_check_branch
          %372 = sbr.rel (%p370) target = $region36
        $region35: #{pitch_and_duration_predictor.1} parent=11 // pred_region
          _
        $region36: #{pitch_and_duration_predictor.1} parent=11 // pred_fallthru
          _
        // Predicated region
        $region37: #{pitch_and_duration_predictor.1} parent=11 // pred_check
          %p373 = pneg %p219
        $region38: #{pitch_and_duration_predictor.1} parent=11 // pred_check_branch
          %375 = sbr.rel (%p373) target = $region40
        $region39: #{pitch_and_duration_predictor.1} parent=11 // pred_region
          _
        $region40: #{pitch_and_duration_predictor.1} parent=11 // pred_fallthru
          _
        // Predicated region
        $region41: #{pitch_and_duration_predictor.1} parent=11 // pred_check
          %p376 = pneg %p240
        $region42: #{pitch_and_duration_predictor.1} parent=11 // pred_check_branch
          %378 = sbr.rel (%p376) target = $region44
        $region43: #{pitch_and_duration_predictor.1} parent=11 // pred_region
          _
        $region44: #{pitch_and_duration_predictor.1} parent=11 // pred_fallthru
          _
        // Predicated region
        $region45: #{pitch_and_duration_predictor.1} parent=11 // pred_check
          %p379 = pneg %p261
        $region46: #{pitch_and_duration_predictor.1} parent=11 // pred_check_branch
          %381 = sbr.rel (%p379) target = $region48
        $region47: #{pitch_and_duration_predictor.1} parent=11 // pred_region
          _
        $region48: #{pitch_and_duration_predictor.1} parent=11 // pred_fallthru
          _
        // Predicated region
        $region49: #{pitch_and_duration_predictor.1} parent=11 // pred_check
          %p382 = pneg %p282
        $region50: #{pitch_and_duration_predictor.1} parent=11 // pred_check_branch
          %384 = sbr.rel (%p382) target = $region52
        $region51: #{pitch_and_duration_predictor.1} parent=11 // pred_region
          _
        $region52: #{pitch_and_duration_predictor.1} parent=11 // pred_fallthru
          _
        // Predicated region
        $region53: #{pitch_and_duration_predictor.1} parent=11 // pred_check
          %p385 = pneg %p303
        $region54: #{pitch_and_duration_predictor.1} parent=11 // pred_check_branch
          %387 = sbr.rel (%p385) target = $region56
        $region55: #{pitch_and_duration_predictor.1} parent=11 // pred_region
          _
        $region56: #{pitch_and_duration_predictor.1} parent=11 // pred_fallthru
          _
      $region12: #{pitch_and_duration_predictor.1} parent=5 // pred_fallthru
        _
      %p388 = scmp.lt.s32.totalorder %s20, 2
      // Predicated region
      $region57: #{pitch_and_duration_predictor.1} parent=5 // pred_check
        %p389 = pneg %p388
      $region58: #{pitch_and_duration_predictor.1} parent=5 // pred_check_branch
        %391 = sbr.rel (%p389) target = $region60
      $region59: #{pitch_and_duration_predictor.1} parent=5 // pred_region
        // Predicated region
        $region61: #{pitch_and_duration_predictor.1} parent=59 // pred_check
          %p392 = pneg %p40
        $region62: #{pitch_and_duration_predictor.1} parent=59 // pred_check_branch
          %394 = sbr.rel (%p392) target = $region64
        $region63: #{pitch_and_duration_predictor.1} parent=59 // pred_region
          %p395 = scmp.lt.s32.totalorder %s20, 1
          %s396 = scalar_select %p395, %s20, 1
          %s397 = smul.addr %s396, 8
          %s398 = scalar_lea.vmem %s0, %s397
        $region64: #{pitch_and_duration_predictor.1} parent=59 // pred_fallthru
          _
        // Predicated region
        $region65: #{pitch_and_duration_predictor.1} parent=59 // pred_check
          %p399 = pneg %p66
        $region66: #{pitch_and_duration_predictor.1} parent=59 // pred_check_branch
          %401 = sbr.rel (%p399) target = $region68
        $region67: #{pitch_and_duration_predictor.1} parent=59 // pred_region
          %p402 = scmp.lt.s32.totalorder %s20, 1
          %s403 = scalar_select %p402, %s20, 1
          %s404 = scalar_lea.vmem %s1, %s403
        $region68: #{pitch_and_duration_predictor.1} parent=59 // pred_fallthru
          _
      $region60: #{pitch_and_duration_predictor.1} parent=5 // pred_fallthru
        _
      %p405 = scmp.le.s32.totalorder 1, %s20
      %p406 = scmp.lt.s32.totalorder %s20, 3
      %p407 = pnand %p405, %p406
      %p408 = pneg %p407
      // Predicated region
      $region69: #{pitch_and_duration_predictor.1} parent=5 // pred_check
        _
      $region70: #{pitch_and_duration_predictor.1} parent=5 // pred_check_branch
        %410 = sbr.rel (%p407) target = $region72
      $region71: #{pitch_and_duration_predictor.1} parent=5 // pred_region
        %s411 = ssub.s32 %s20, 1
        // Predicated region
        $region73: #{pitch_and_duration_predictor.1} parent=71 // pred_check
          %p412 = pneg %p177
        $region74: #{pitch_and_duration_predictor.1} parent=71 // pred_check_branch
          %414 = sbr.rel (%p412) target = $region76
        $region75: #{pitch_and_duration_predictor.1} parent=71 // pred_region
          %416 = dma.done [#allocation3], 1024
        $region76: #{pitch_and_duration_predictor.1} parent=71 // pred_fallthru
          _
        %p417 = scmp.lt.s32.totalorder %s25, 1
        %s418 = scalar_select %p417, %s25, 1
        %s419 = smul.addr %s418, 8
        %s420 = scalar_lea.vmem %s0, %s419
        %p421 = pneg %p46
        %p422 = pneg %p43
        %p423 = scmp.lt.s32.totalorder %s25, 1
        %s424 = scalar_select %p423, %s25, 1
        %s425 = scalar_lea.vmem %s1, %s424
        %p426 = pneg %p72
        %p427 = pneg %p69
        %p428 = pneg %p93
        %p429 = pneg %p90
        %p430 = pneg %p114
        %p431 = pneg %p111
        %p432 = pneg %p135
        %p433 = pneg %p132
        %p434 = pneg %p156
        %p435 = pneg %p153
        %p436 = pneg %p177
        %p437 = pneg %p174
        %p438 = pneg %p198
        %p439 = pneg %p195
        %p440 = pneg %p219
        %p441 = pneg %p216
        %p442 = pneg %p240
        %p443 = pneg %p237
        %p444 = pneg %p261
        %p445 = pneg %p258
        %p446 = pneg %p282
        %p447 = pneg %p279
        %p448 = pneg %p303
        %p449 = pneg %p300
        %p450 = pneg %p329
        %p451 = pneg %p326
        %p452 = scmp.lt.s32.totalorder %s25, 1
        %s453 = scalar_select %p452, %s25, 1
        %s454 = smul.addr %s453, 2
        %s455 = scalar_lea.vmem %s13, %s454
        %p456 = scmp.lt.s32.totalorder %s25, 1
        %s457 = scalar_select %p456, %s25, 1
        %s458 = smul.addr %s457, 8
        %s459 = scalar_lea.vmem %s0, %s458
        %p460 = scmp.lt.s32.totalorder %s25, 1
        %s461 = scalar_select %p460, %s25, 1
        %s462 = scalar_lea.vmem %s1, %s461
        %p463 = scmp.lt.s32.totalorder %s25, 1
        %s464 = scalar_select %p463, %s25, 1
        %s465 = smul.addr %s464, 2
        %s466 = scalar_lea.vmem %s13, %s465
        %v467 = vld [vmem:[%s459] sm:$0xff]
        %v468 = vld [vmem:[%s2] sm:$0x1]
        %v469 = vld [vmem:[%s2 + $0x1] sm:$0x1]
        %vm470 = vcmask 261120
        %v471 = vsel %vm470, %v467, 0.0
        %472 = vadd.xlane.f32.xlu0 %v471
        %v473 = vpop.xlane.xlu0 %472
        %v474 = vrcp.pop 32.0
        %v475 = vmul.f32 32.0, %v474
        %v476 = vsub.f32 1.0, %v475
        %v477 = vmul.f32 %v474, %v476
        %v478 = vadd.f32 %v474, %v477
        %vm479 = vweird.f32 %v474
        %v480 = vsel %vm479, %v474, %v478
        %v481 = vmul.f32 %v473, %v480
        %v482 = vsub.f32 %v467, %v481
        %v483 = vmul.f32 %v482, %v482
        %v484 = vsel %vm470, %v483, 0.0
        %485 = vadd.xlane.f32.xlu0 %v484
        %v486 = vpop.xlane.xlu0 %485
        %v487 = vmul.f32 %v486, %v480
        %v488 = vadd.f32 %v487, 1e-05
        %v489 = vrsqrt.pop %v488
        %v490 = vmul.f32 %v489, %v488
        %v491 = vmul.f32 %v490, %v489
        %v492 = vmul.f32 0.5, %v491
        %v493 = vsub.f32 1.5, %v492
        %v494 = vmul.f32 %v489, %v493
        %vm495 = vweird.f32 %v488
        %vm496 = vweird.f32 %v489
        %vm497 = vmor %vm495, %vm496
        %v498 = vsel %vm497, %v489, %v494
        %v499 = vmul.f32 %v482, %v498
        %v500 = vperm.slane %v468, 0
        %v501 = vmul.f32 %v499, %v500
        %v502 = vperm.slane %v469, 0
        %v503 = vadd.f32 %v501, %v502
        %v504 = vld [vmem:[%s3] sm:$0xff]
        %v505 = vld [vmem:[%s3 + $0x8] sm:$0xff]
        %v506 = vld [vmem:[%s3 + $0x10] sm:$0xff]
        %v507 = vld [vmem:[%s3 + $0x18] sm:$0xff]
        %v508 = vld [vmem:[%s4] sm:$0x1]
        %v510 = vperm.slane %v508, 0
        %v513 = vsel %vm470, %v503, 0
        %515 = vmatpush.msra.mxu0 0.0
        %516 = vmatpush.msra.mxu0 0.0
        %517 = vmatpush.msra.mxu0 0.0
        %518 = vmatpush.msra.mxu0 0.0
        %519 = vmatpush.msra.mxu0 0.0
        %520 = vmatpush.msra.mxu0 0.0
        %521 = vmatpush.msra.mxu0 0.0
        %522 = vmatpush.msra.mxu0 0.0
        %523 = vmatpush.msra.mxu0 0.0
        %524 = vmatpush.msra.mxu0 0.0
        %525 = vmatpush.msra.mxu0 0.0
        %526 = vmatpush.msra.mxu0 0.0
        %527 = vmatpush.msra.mxu0 %v507
        %528 = vmatpush.msra.mxu0 %v506
        %529 = vmatpush.msra.mxu0 %v505
        %530 = vmatpush.msra.mxu0 %v504
        %531 = vmatmul.f32.gmra.mxu0 %v513
        %v532 = vpop.f32.mrf.mxu0
        %v533 = vadd.f32 %v510, %v532
        %534 = vdwg.mxu0
        %v535 = vld [vmem:[%s2 + $0x2] sm:$0x1]
        %537 = vrot.lane.b32.xlu0 %v533, 96
        %v538 = vpop.permute.xlu0 %537
        %vm539 = vcmask 130048
        %v540 = vsel %vm539, %v533, 0
        %v542 = vsel %vm539, %v538, 0
        %544 = vmatpush.xpose.msra.mxu0 0.0
        %545 = vmatpush.xpose.msra.mxu0 0.0
        %546 = vmatpush.xpose.msra.mxu0 0.0
        %547 = vmatpush.xpose.msra.mxu0 0.0
        %548 = vmatpush.xpose.msra.mxu0 0.0
        %549 = vmatpush.xpose.msra.mxu0 0.0
        %550 = vmatpush.xpose.msra.mxu0 0.0
        %551 = vmatpush.xpose.msra.mxu0 0.0
        %552 = vmatpush.xpose.msra.mxu0 0.0
        %553 = vmatpush.xpose.msra.mxu0 0.0
        %554 = vmatpush.xpose.msra.mxu0 0.0
        %555 = vmatpush.xpose.msra.mxu0 0.0
        %556 = vmatpush.xpose.msra.mxu0 0.0
        %557 = vmatpush.xpose.msra.mxu0 0.0
        %558 = vmatpush.xpose.msra.mxu0 0.0
        %559 = vmatpush.xpose.msra.mxu0 %v542
        %560 = vmatmul.f32.gmra.mxu0 %v540
        %v561 = vpop.f32.mrf.mxu0
        %v562 = vadd.f32 0.0, %v561
        %563 = vdwg.mxu0
        %v564 = vmul.f32 %v562, 0.25
        %vm565 = vcmask 64512
        %v566 = vsel %vm565, %v564, -inf
        %567 = vmax.xlane.f32.xlu0 %v566
        %v568 = vpop.xlane.xlu0 %567
        %v569 = vsub.f32 %v564, %v568
        %v570 = vmul.f32 %v569, 1.442695
        %v571 = vpow.pop %v570
        %v572 = vsel %vm565, %v571, 0.0
        %573 = vadd.xlane.f32.xlu0 %v572
        %v574 = vpop.xlane.xlu0 %573
        %v575 = vrcp.pop %v574
        %v576 = vmul.f32 %v571, %v575
        %577 = vrot.lane.b32.xlu0 %v533, 64
        %v578 = vpop.permute.xlu0 %577
        %v581 = vsel %vm565, %v576, 0
        %583 = vmatpush.msra.mxu0 0.0
        %584 = vmatpush.msra.mxu0 0.0
        %585 = vmatpush.msra.mxu0 0.0
        %586 = vmatpush.msra.mxu0 0.0
        %587 = vmatpush.msra.mxu0 0.0
        %588 = vmatpush.msra.mxu0 0.0
        %589 = vmatpush.msra.mxu0 0.0
        %590 = vmatpush.msra.mxu0 0.0
        %591 = vmatpush.msra.mxu0 0.0
        %592 = vmatpush.msra.mxu0 0.0
        %593 = vmatpush.msra.mxu0 0.0
        %594 = vmatpush.msra.mxu0 0.0
        %595 = vmatpush.msra.mxu0 0.0
        %596 = vmatpush.msra.mxu0 0.0
        %597 = vmatpush.msra.mxu0 0.0
        %598 = vmatpush.msra.mxu0 %v578
        %599 = vmatmul.f32.gmra.mxu0 %v581
        %v600 = vpop.f32.mrf.mxu0
        %v601 = vadd.f32 0.0, %v600
        %602 = vdwg.mxu0
        %v603 = vld [vmem:[%s5] sm:$0xff]
        %v604 = vld [vmem:[%s5 + $0x8] sm:$0xff]
        %v606 = vsel %vm539, %v601, 0
        %608 = vmatpush.msra.mxu0 0.0
        %609 = vmatpush.msra.mxu0 0.0
        %610 = vmatpush.msra.mxu0 0.0
        %611 = vmatpush.msra.mxu0 0.0
        %612 = vmatpush.msra.mxu0 0.0
        %613 = vmatpush.msra.mxu0 0.0
        %614 = vmatpush.msra.mxu0 0.0
        %615 = vmatpush.msra.mxu0 0.0
        %616 = vmatpush.msra.mxu0 0.0
        %617 = vmatpush.msra.mxu0 0.0
        %618 = vmatpush.msra.mxu0 0.0
        %619 = vmatpush.msra.mxu0 0.0
        %620 = vmatpush.msra.mxu0 0.0
        %621 = vmatpush.msra.mxu0 0.0
        %622 = vmatpush.msra.mxu0 %v604
        %623 = vmatpush.msra.mxu0 %v603
        %624 = vmatmul.f32.gmra.mxu0 %v606
        %v625 = vpop.f32.mrf.mxu0
        %v626 = vadd.f32 0.0, %v625
        %627 = vdwg.mxu0
        %v628 = vperm.slane %v535, 0
        %v629 = vadd.f32 %v628, %v626
        %630 = vrot.lane.b32.xlu0 %v533, 112
        %v631 = vpop.permute.xlu0 %630
        %632 = vrot.lane.b32.xlu0 %v533, 80
        %v633 = vpop.permute.xlu0 %632
        %v634 = vsel %vm539, %v631, 0
        %v636 = vsel %vm539, %v633, 0
        %638 = vmatpush.xpose.msra.mxu0 0.0
        %639 = vmatpush.xpose.msra.mxu0 0.0
        %640 = vmatpush.xpose.msra.mxu0 0.0
        %641 = vmatpush.xpose.msra.mxu0 0.0
        %642 = vmatpush.xpose.msra.mxu0 0.0
        %643 = vmatpush.xpose.msra.mxu0 0.0
        %644 = vmatpush.xpose.msra.mxu0 0.0
        %645 = vmatpush.xpose.msra.mxu0 0.0
        %646 = vmatpush.xpose.msra.mxu0 0.0
        %647 = vmatpush.xpose.msra.mxu0 0.0
        %648 = vmatpush.xpose.msra.mxu0 0.0
        %649 = vmatpush.xpose.msra.mxu0 0.0
        %650 = vmatpush.xpose.msra.mxu0 0.0
        %651 = vmatpush.xpose.msra.mxu0 0.0
        %652 = vmatpush.xpose.msra.mxu0 0.0
        %653 = vmatpush.xpose.msra.mxu0 %v636
        %654 = vmatmul.f32.gmra.mxu0 %v634
        %v655 = vpop.f32.mrf.mxu0
        %v656 = vadd.f32 0.0, %v655
        %657 = vdwg.mxu0
        %v658 = vmul.f32 %v656, 0.25
        %v659 = vsel %vm565, %v658, -inf
        %660 = vmax.xlane.f32.xlu0 %v659
        %v661 = vpop.xlane.xlu0 %660
        %v662 = vsub.f32 %v658, %v661
        %v663 = vmul.f32 %v662, 1.442695
        %v664 = vpow.pop %v663
        %v665 = vsel %vm565, %v664, 0.0
        %666 = vadd.xlane.f32.xlu0 %v665
        %v667 = vpop.xlane.xlu0 %666
        %v668 = vrcp.pop %v667
        %v669 = vmul.f32 %v664, %v668
        %670 = vrot.lane.b32.xlu0 %v533, 48
        %v671 = vpop.permute.xlu0 %670
        %v674 = vsel %vm565, %v669, 0
        %676 = vmatpush.msra.mxu0 0.0
        %677 = vmatpush.msra.mxu0 0.0
        %678 = vmatpush.msra.mxu0 0.0
        %679 = vmatpush.msra.mxu0 0.0
        %680 = vmatpush.msra.mxu0 0.0
        %681 = vmatpush.msra.mxu0 0.0
        %682 = vmatpush.msra.mxu0 0.0
        %683 = vmatpush.msra.mxu0 0.0
        %684 = vmatpush.msra.mxu0 0.0
        %685 = vmatpush.msra.mxu0 0.0
        %686 = vmatpush.msra.mxu0 0.0
        %687 = vmatpush.msra.mxu0 0.0
        %688 = vmatpush.msra.mxu0 0.0
        %689 = vmatpush.msra.mxu0 0.0
        %690 = vmatpush.msra.mxu0 0.0
        %691 = vmatpush.msra.mxu0 %v671
        %692 = vmatmul.f32.gmra.mxu0 %v674
        %v693 = vpop.f32.mrf.mxu0
        %v694 = vadd.f32 0.0, %v693
        %695 = vdwg.mxu0
        %v696 = vld [vmem:[%s5 + $0x10] sm:$0xff]
        %v697 = vld [vmem:[%s5 + $0x18] sm:$0xff]
        %v699 = vsel %vm539, %v694, 0
        %701 = vmatpush.msra.mxu0 0.0
        %702 = vmatpush.msra.mxu0 0.0
        %703 = vmatpush.msra.mxu0 0.0
        %704 = vmatpush.msra.mxu0 0.0
        %705 = vmatpush.msra.mxu0 0.0
        %706 = vmatpush.msra.mxu0 0.0
        %707 = vmatpush.msra.mxu0 0.0
        %708 = vmatpush.msra.mxu0 0.0
        %709 = vmatpush.msra.mxu0 0.0
        %710 = vmatpush.msra.mxu0 0.0
        %711 = vmatpush.msra.mxu0 0.0
        %712 = vmatpush.msra.mxu0 0.0
        %713 = vmatpush.msra.mxu0 0.0
        %714 = vmatpush.msra.mxu0 0.0
        %715 = vmatpush.msra.mxu0 %v697
        %716 = vmatpush.msra.mxu0 %v696
        %717 = vmatmul.f32.gmra.mxu0 %v699
        %v718 = vpop.f32.mrf.mxu0
        %v719 = vadd.f32 0.0, %v718
        %720 = vdwg.mxu0
        %v721 = vadd.f32 %v629, %v719
        %v722 = vadd.f32 %v467, %v721
        %v723 = vld [vmem:[%s2 + $0x3] sm:$0x1]
        %v724 = vld [vmem:[%s2 + $0x4] sm:$0x1]
        %v725 = vsel %vm470, %v722, 0.0
        %726 = vadd.xlane.f32.xlu0 %v725
        %v727 = vpop.xlane.xlu0 %726
        %v728 = vmul.f32 %v727, %v480
        %v729 = vsub.f32 %v722, %v728
        %v730 = vmul.f32 %v729, %v729
        %v731 = vsel %vm470, %v730, 0.0
        %732 = vadd.xlane.f32.xlu0 %v731
        %v733 = vpop.xlane.xlu0 %732
        %v734 = vmul.f32 %v733, %v480
        %v735 = vadd.f32 %v734, 1e-05
        %v736 = vrsqrt.pop %v735
        %v737 = vmul.f32 %v736, %v735
        %v738 = vmul.f32 %v737, %v736
        %v739 = vmul.f32 0.5, %v738
        %v740 = vsub.f32 1.5, %v739
        %v741 = vmul.f32 %v736, %v740
        %vm742 = vweird.f32 %v735
        %vm743 = vweird.f32 %v736
        %vm744 = vmor %vm742, %vm743
        %v745 = vsel %vm744, %v736, %v741
        %v746 = vmul.f32 %v729, %v745
        %v747 = vperm.slane %v723, 0
        %v748 = vmul.f32 %v746, %v747
        %v749 = vperm.slane %v724, 0
        %v750 = vadd.f32 %v748, %v749
        %v751 = vld [vmem:[#allocation2] sm:$0xff]
        %v752 = vld [vmem:[#allocation2 + $0x8] sm:$0xff]
        %v753 = vld [vmem:[#allocation2 + $0x10] sm:$0xff]
        %v754 = vld [vmem:[#allocation2 + $0x18] sm:$0xff]
        %v755 = vld [vmem:[%s7] sm:$0x1]
        %v757 = vperm.slane %v755, 0
        %v760 = vsel %vm470, %v750, 0
        %762 = vmatpush.msra.mxu0 0.0
        %763 = vmatpush.msra.mxu0 0.0
        %764 = vmatpush.msra.mxu0 0.0
        %765 = vmatpush.msra.mxu0 0.0
        %766 = vmatpush.msra.mxu0 0.0
        %767 = vmatpush.msra.mxu0 0.0
        %768 = vmatpush.msra.mxu0 0.0
        %769 = vmatpush.msra.mxu0 0.0
        %770 = vmatpush.msra.mxu0 0.0
        %771 = vmatpush.msra.mxu0 0.0
        %772 = vmatpush.msra.mxu0 0.0
        %773 = vmatpush.msra.mxu0 0.0
        %774 = vmatpush.msra.mxu0 %v754
        %775 = vmatpush.msra.mxu0 %v753
        %776 = vmatpush.msra.mxu0 %v752
        %777 = vmatpush.msra.mxu0 %v751
        %778 = vmatmul.f32.gmra.mxu0 %v760
        %v779 = vpop.f32.mrf.mxu0
        %v780 = vadd.f32 %v757, %v779
        %781 = vdwg.mxu0
        %v782 = vmax.f32 %v780, 0.0
        %v783 = vld [vmem:[%s8] sm:$0xff]
        %v784 = vld [vmem:[%s8 + $0x8] sm:$0xff]
        %v785 = vld [vmem:[%s8 + $0x10] sm:$0xff]
        %v786 = vld [vmem:[%s8 + $0x18] sm:$0xff]
        %v787 = vld [vmem:[%s8 + $0x20] sm:$0xff]
        %v788 = vld [vmem:[%s8 + $0x28] sm:$0xff]
        %v789 = vld [vmem:[%s8 + $0x30] sm:$0xff]
        %v790 = vld [vmem:[%s8 + $0x38] sm:$0xff]
        %v791 = vld [vmem:[%s2 + $0x5] sm:$0x1]
        %v792 = vperm.slane %v791, 0
        %vm793 = vcmask 523264
        %v795 = vsel %vm793, %v782, 0
        %797 = vmatpush.msra.mxu0 0.0
        %798 = vmatpush.msra.mxu0 0.0
        %799 = vmatpush.msra.mxu0 0.0
        %800 = vmatpush.msra.mxu0 0.0
        %801 = vmatpush.msra.mxu0 0.0
        %802 = vmatpush.msra.mxu0 0.0
        %803 = vmatpush.msra.mxu0 0.0
        %804 = vmatpush.msra.mxu0 0.0
        %805 = vmatpush.msra.mxu0 %v790
        %806 = vmatpush.msra.mxu0 %v789
        %807 = vmatpush.msra.mxu0 %v788
        %808 = vmatpush.msra.mxu0 %v787
        %809 = vmatpush.msra.mxu0 %v786
        %810 = vmatpush.msra.mxu0 %v785
        %811 = vmatpush.msra.mxu0 %v784
        %812 = vmatpush.msra.mxu0 %v783
        %813 = vmatmul.f32.gmra.mxu0 %v795
        %v814 = vpop.f32.mrf.mxu0
        %v815 = vadd.f32 %v792, %v814
        %816 = vdwg.mxu0
        %v817 = vadd.f32 %v722, %v815
        %s818 = scalar_lea.vmem %s2, 8
        %v819 = vld [vmem:[%s818] sm:$0x1]
        %v820 = vld [vmem:[%s818 + $0x1] sm:$0x1]
        %v821 = vsel %vm470, %v817, 0.0
        %822 = vadd.xlane.f32.xlu0 %v821
        %v823 = vpop.xlane.xlu0 %822
        %v824 = vmul.f32 %v823, %v480
        %v825 = vsub.f32 %v817, %v824
        %v826 = vmul.f32 %v825, %v825
        %v827 = vsel %vm470, %v826, 0.0
        %828 = vadd.xlane.f32.xlu0 %v827
        %v829 = vpop.xlane.xlu0 %828
        %v830 = vmul.f32 %v829, %v480
        %v831 = vadd.f32 %v830, 1e-05
        %v832 = vrsqrt.pop %v831
        %v833 = vmul.f32 %v832, %v831
        %v834 = vmul.f32 %v833, %v832
        %v835 = vmul.f32 0.5, %v834
        %v836 = vsub.f32 1.5, %v835
        %v837 = vmul.f32 %v832, %v836
        %vm838 = vweird.f32 %v831
        %vm839 = vweird.f32 %v832
        %vm840 = vmor %vm838, %vm839
        %v841 = vsel %vm840, %v832, %v837
        %v842 = vmul.f32 %v825, %v841
        %v843 = vperm.slane %v819, 0
        %v844 = vmul.f32 %v842, %v843
        %v845 = vperm.slane %v820, 0
        %v846 = vadd.f32 %v844, %v845
        %s847 = scalar_lea.vmem %s3, 32
        %v848 = vld [vmem:[%s847] sm:$0xff]
        %v849 = vld [vmem:[%s847 + $0x8] sm:$0xff]
        %v850 = vld [vmem:[%s847 + $0x10] sm:$0xff]
        %v851 = vld [vmem:[%s847 + $0x18] sm:$0xff]
        %s852 = scalar_lea.vmem %s4, 1
        %v853 = vld [vmem:[%s852] sm:$0x1]
        %v855 = vperm.slane %v853, 0
        %v858 = vsel %vm470, %v846, 0
        %860 = vmatpush.msra.mxu0 0.0
        %861 = vmatpush.msra.mxu0 0.0
        %862 = vmatpush.msra.mxu0 0.0
        %863 = vmatpush.msra.mxu0 0.0
        %864 = vmatpush.msra.mxu0 0.0
        %865 = vmatpush.msra.mxu0 0.0
        %866 = vmatpush.msra.mxu0 0.0
        %867 = vmatpush.msra.mxu0 0.0
        %868 = vmatpush.msra.mxu0 0.0
        %869 = vmatpush.msra.mxu0 0.0
        %870 = vmatpush.msra.mxu0 0.0
        %871 = vmatpush.msra.mxu0 0.0
        %872 = vmatpush.msra.mxu0 %v851
        %873 = vmatpush.msra.mxu0 %v850
        %874 = vmatpush.msra.mxu0 %v849
        %875 = vmatpush.msra.mxu0 %v848
        %876 = vmatmul.f32.gmra.mxu0 %v858
        %v877 = vpop.f32.mrf.mxu0
        %v878 = vadd.f32 %v855, %v877
        %879 = vdwg.mxu0
        %v880 = vld [vmem:[%s818 + $0x2] sm:$0x1]
        %882 = vrot.lane.b32.xlu0 %v878, 96
        %v883 = vpop.permute.xlu0 %882
        %v884 = vsel %vm539, %v878, 0
        %v886 = vsel %vm539, %v883, 0
        %888 = vmatpush.xpose.msra.mxu0 0.0
        %889 = vmatpush.xpose.msra.mxu0 0.0
        %890 = vmatpush.xpose.msra.mxu0 0.0
        %891 = vmatpush.xpose.msra.mxu0 0.0
        %892 = vmatpush.xpose.msra.mxu0 0.0
        %893 = vmatpush.xpose.msra.mxu0 0.0
        %894 = vmatpush.xpose.msra.mxu0 0.0
        %895 = vmatpush.xpose.msra.mxu0 0.0
        %896 = vmatpush.xpose.msra.mxu0 0.0
        %897 = vmatpush.xpose.msra.mxu0 0.0
        %898 = vmatpush.xpose.msra.mxu0 0.0
        %899 = vmatpush.xpose.msra.mxu0 0.0
        %900 = vmatpush.xpose.msra.mxu0 0.0
        %901 = vmatpush.xpose.msra.mxu0 0.0
        %902 = vmatpush.xpose.msra.mxu0 0.0
        %903 = vmatpush.xpose.msra.mxu0 %v886
        %904 = vmatmul.f32.gmra.mxu0 %v884
        %v905 = vpop.f32.mrf.mxu0
        %v906 = vadd.f32 0.0, %v905
        %907 = vdwg.mxu0
        %v908 = vmul.f32 %v906, 0.25
        %v909 = vsel %vm565, %v908, -inf
        %910 = vmax.xlane.f32.xlu0 %v909
        %v911 = vpop.xlane.xlu0 %910
        %v912 = vsub.f32 %v908, %v911
        %v913 = vmul.f32 %v912, 1.442695
        %v914 = vpow.pop %v913
        %v915 = vsel %vm565, %v914, 0.0
        %916 = vadd.xlane.f32.xlu0 %v915
        %v917 = vpop.xlane.xlu0 %916
        %v918 = vrcp.pop %v917
        %v919 = vmul.f32 %v914, %v918
        %920 = vrot.lane.b32.xlu0 %v878, 64
        %v921 = vpop.permute.xlu0 %920
        %v924 = vsel %vm565, %v919, 0
        %926 = vmatpush.msra.mxu0 0.0
        %927 = vmatpush.msra.mxu0 0.0
        %928 = vmatpush.msra.mxu0 0.0
        %929 = vmatpush.msra.mxu0 0.0
        %930 = vmatpush.msra.mxu0 0.0
        %931 = vmatpush.msra.mxu0 0.0
        %932 = vmatpush.msra.mxu0 0.0
        %933 = vmatpush.msra.mxu0 0.0
        %934 = vmatpush.msra.mxu0 0.0
        %935 = vmatpush.msra.mxu0 0.0
        %936 = vmatpush.msra.mxu0 0.0
        %937 = vmatpush.msra.mxu0 0.0
        %938 = vmatpush.msra.mxu0 0.0
        %939 = vmatpush.msra.mxu0 0.0
        %940 = vmatpush.msra.mxu0 0.0
        %941 = vmatpush.msra.mxu0 %v921
        %942 = vmatmul.f32.gmra.mxu0 %v924
        %v943 = vpop.f32.mrf.mxu0
        %v944 = vadd.f32 0.0, %v943
        %945 = vdwg.mxu0
        %s946 = scalar_lea.vmem %s5, 32
        %v947 = vld [vmem:[%s946] sm:$0xff]
        %v948 = vld [vmem:[%s946 + $0x8] sm:$0xff]
        %v950 = vsel %vm539, %v944, 0
        %952 = vmatpush.msra.mxu0 0.0
        %953 = vmatpush.msra.mxu0 0.0
        %954 = vmatpush.msra.mxu0 0.0
        %955 = vmatpush.msra.mxu0 0.0
        %956 = vmatpush.msra.mxu0 0.0
        %957 = vmatpush.msra.mxu0 0.0
        %958 = vmatpush.msra.mxu0 0.0
        %959 = vmatpush.msra.mxu0 0.0
        %960 = vmatpush.msra.mxu0 0.0
        %961 = vmatpush.msra.mxu0 0.0
        %962 = vmatpush.msra.mxu0 0.0
        %963 = vmatpush.msra.mxu0 0.0
        %964 = vmatpush.msra.mxu0 0.0
        %965 = vmatpush.msra.mxu0 0.0
        %966 = vmatpush.msra.mxu0 %v948
        %967 = vmatpush.msra.mxu0 %v947
        %968 = vmatmul.f32.gmra.mxu0 %v950
        %v969 = vpop.f32.mrf.mxu0
        %v970 = vadd.f32 0.0, %v969
        %971 = vdwg.mxu0
        %v972 = vperm.slane %v880, 0
        %v973 = vadd.f32 %v972, %v970
        %974 = vrot.lane.b32.xlu0 %v878, 112
        %v975 = vpop.permute.xlu0 %974
        %976 = vrot.lane.b32.xlu0 %v878, 80
        %v977 = vpop.permute.xlu0 %976
        %v978 = vsel %vm539, %v975, 0
        %v980 = vsel %vm539, %v977, 0
        %982 = vmatpush.xpose.msra.mxu0 0.0
        %983 = vmatpush.xpose.msra.mxu0 0.0
        %984 = vmatpush.xpose.msra.mxu0 0.0
        %985 = vmatpush.xpose.msra.mxu0 0.0
        %986 = vmatpush.xpose.msra.mxu0 0.0
        %987 = vmatpush.xpose.msra.mxu0 0.0
        %988 = vmatpush.xpose.msra.mxu0 0.0
        %989 = vmatpush.xpose.msra.mxu0 0.0
        %990 = vmatpush.xpose.msra.mxu0 0.0
        %991 = vmatpush.xpose.msra.mxu0 0.0
        %992 = vmatpush.xpose.msra.mxu0 0.0
        %993 = vmatpush.xpose.msra.mxu0 0.0
        %994 = vmatpush.xpose.msra.mxu0 0.0
        %995 = vmatpush.xpose.msra.mxu0 0.0
        %996 = vmatpush.xpose.msra.mxu0 0.0
        %997 = vmatpush.xpose.msra.mxu0 %v980
        %998 = vmatmul.f32.gmra.mxu0 %v978
        %v999 = vpop.f32.mrf.mxu0
        %v1000 = vadd.f32 0.0, %v999
        %1001 = vdwg.mxu0
        %v1002 = vmul.f32 %v1000, 0.25
        %v1003 = vsel %vm565, %v1002, -inf
        %1004 = vmax.xlane.f32.xlu0 %v1003
        %v1005 = vpop.xlane.xlu0 %1004
        %v1006 = vsub.f32 %v1002, %v1005
        %v1007 = vmul.f32 %v1006, 1.442695
        %v1008 = vpow.pop %v1007
        %v1009 = vsel %vm565, %v1008, 0.0
        %1010 = vadd.xlane.f32.xlu0 %v1009
        %v1011 = vpop.xlane.xlu0 %1010
        %v1012 = vrcp.pop %v1011
        %v1013 = vmul.f32 %v1008, %v1012
        %1014 = vrot.lane.b32.xlu0 %v878, 48
        %v1015 = vpop.permute.xlu0 %1014
        %v1018 = vsel %vm565, %v1013, 0
        %1020 = vmatpush.msra.mxu0 0.0
        %1021 = vmatpush.msra.mxu0 0.0
        %1022 = vmatpush.msra.mxu0 0.0
        %1023 = vmatpush.msra.mxu0 0.0
        %1024 = vmatpush.msra.mxu0 0.0
        %1025 = vmatpush.msra.mxu0 0.0
        %1026 = vmatpush.msra.mxu0 0.0
        %1027 = vmatpush.msra.mxu0 0.0
        %1028 = vmatpush.msra.mxu0 0.0
        %1029 = vmatpush.msra.mxu0 0.0
        %1030 = vmatpush.msra.mxu0 0.0
        %1031 = vmatpush.msra.mxu0 0.0
        %1032 = vmatpush.msra.mxu0 0.0
        %1033 = vmatpush.msra.mxu0 0.0
        %1034 = vmatpush.msra.mxu0 0.0
        %1035 = vmatpush.msra.mxu0 %v1015
        %1036 = vmatmul.f32.gmra.mxu0 %v1018
        %v1037 = vpop.f32.mrf.mxu0
        %v1038 = vadd.f32 0.0, %v1037
        %1039 = vdwg.mxu0
        %v1040 = vld [vmem:[%s946 + $0x10] sm:$0xff]
        %v1041 = vld [vmem:[%s946 + $0x18] sm:$0xff]
        %v1043 = vsel %vm539, %v1038, 0
        %1045 = vmatpush.msra.mxu0 0.0
        %1046 = vmatpush.msra.mxu0 0.0
        %1047 = vmatpush.msra.mxu0 0.0
        %1048 = vmatpush.msra.mxu0 0.0
        %1049 = vmatpush.msra.mxu0 0.0
        %1050 = vmatpush.msra.mxu0 0.0
        %1051 = vmatpush.msra.mxu0 0.0
        %1052 = vmatpush.msra.mxu0 0.0
        %1053 = vmatpush.msra.mxu0 0.0
        %1054 = vmatpush.msra.mxu0 0.0
        %1055 = vmatpush.msra.mxu0 0.0
        %1056 = vmatpush.msra.mxu0 0.0
        %1057 = vmatpush.msra.mxu0 0.0
        %1058 = vmatpush.msra.mxu0 0.0
        %1059 = vmatpush.msra.mxu0 %v1041
        %1060 = vmatpush.msra.mxu0 %v1040
        %1061 = vmatmul.f32.gmra.mxu0 %v1043
        %v1062 = vpop.f32.mrf.mxu0
        %v1063 = vadd.f32 0.0, %v1062
        %1064 = vdwg.mxu0
        %v1065 = vadd.f32 %v973, %v1063
        %v1066 = vadd.f32 %v817, %v1065
        %v1067 = vld [vmem:[%s818 + $0x3] sm:$0x1]
        %v1068 = vld [vmem:[%s818 + $0x4] sm:$0x1]
        %v1069 = vsel %vm470, %v1066, 0.0
        %1070 = vadd.xlane.f32.xlu0 %v1069
        %v1071 = vpop.xlane.xlu0 %1070
        %v1072 = vmul.f32 %v1071, %v480
        %v1073 = vsub.f32 %v1066, %v1072
        %v1074 = vmul.f32 %v1073, %v1073
        %v1075 = vsel %vm470, %v1074, 0.0
        %1076 = vadd.xlane.f32.xlu0 %v1075
        %v1077 = vpop.xlane.xlu0 %1076
        %v1078 = vmul.f32 %v1077, %v480
        %v1079 = vadd.f32 %v1078, 1e-05
        %v1080 = vrsqrt.pop %v1079
        %v1081 = vmul.f32 %v1080, %v1079
        %v1082 = vmul.f32 %v1081, %v1080
        %v1083 = vmul.f32 0.5, %v1082
        %v1084 = vsub.f32 1.5, %v1083
        %v1085 = vmul.f32 %v1080, %v1084
        %vm1086 = vweird.f32 %v1079
        %vm1087 = vweird.f32 %v1080
        %vm1088 = vmor %vm1086, %vm1087
        %v1089 = vsel %vm1088, %v1080, %v1085
        %v1090 = vmul.f32 %v1073, %v1089
        %v1091 = vperm.slane %v1067, 0
        %v1092 = vmul.f32 %v1090, %v1091
        %v1093 = vperm.slane %v1068, 0
        %v1094 = vadd.f32 %v1092, %v1093
        %s1095 = scalar_lea.vmem [#allocation2], 32
        %v1096 = vld [vmem:[%s1095] sm:$0xff]
        %v1097 = vld [vmem:[%s1095 + $0x8] sm:$0xff]
        %v1098 = vld [vmem:[%s1095 + $0x10] sm:$0xff]
        %v1099 = vld [vmem:[%s1095 + $0x18] sm:$0xff]
        %s1100 = scalar_lea.vmem %s7, 1
        %v1101 = vld [vmem:[%s1100] sm:$0x1]
        %v1103 = vperm.slane %v1101, 0
        %v1106 = vsel %vm470, %v1094, 0
        %1108 = vmatpush.msra.mxu0 0.0
        %1109 = vmatpush.msra.mxu0 0.0
        %1110 = vmatpush.msra.mxu0 0.0
        %1111 = vmatpush.msra.mxu0 0.0
        %1112 = vmatpush.msra.mxu0 0.0
        %1113 = vmatpush.msra.mxu0 0.0
        %1114 = vmatpush.msra.mxu0 0.0
        %1115 = vmatpush.msra.mxu0 0.0
        %1116 = vmatpush.msra.mxu0 0.0
        %1117 = vmatpush.msra.mxu0 0.0
        %1118 = vmatpush.msra.mxu0 0.0
        %1119 = vmatpush.msra.mxu0 0.0
        %1120 = vmatpush.msra.mxu0 %v1099
        %1121 = vmatpush.msra.mxu0 %v1098
        %1122 = vmatpush.msra.mxu0 %v1097
        %1123 = vmatpush.msra.mxu0 %v1096
        %1124 = vmatmul.f32.gmra.mxu0 %v1106
        %v1125 = vpop.f32.mrf.mxu0
        %v1126 = vadd.f32 %v1103, %v1125
        %1127 = vdwg.mxu0
        %v1128 = vmax.f32 %v1126, 0.0
        %s1129 = scalar_lea.vmem %s8, 64
        %v1130 = vld [vmem:[%s1129] sm:$0xff]
        %v1131 = vld [vmem:[%s1129 + $0x8] sm:$0xff]
        %v1132 = vld [vmem:[%s1129 + $0x10] sm:$0xff]
        %v1133 = vld [vmem:[%s1129 + $0x18] sm:$0xff]
        %v1134 = vld [vmem:[%s1129 + $0x20] sm:$0xff]
        %v1135 = vld [vmem:[%s1129 + $0x28] sm:$0xff]
        %v1136 = vld [vmem:[%s1129 + $0x30] sm:$0xff]
        %v1137 = vld [vmem:[%s1129 + $0x38] sm:$0xff]
        %v1138 = vld [vmem:[%s818 + $0x5] sm:$0x1]
        %v1139 = vperm.slane %v1138, 0
        %v1141 = vsel %vm793, %v1128, 0
        %1143 = vmatpush.msra.mxu0 0.0
        %1144 = vmatpush.msra.mxu0 0.0
        %1145 = vmatpush.msra.mxu0 0.0
        %1146 = vmatpush.msra.mxu0 0.0
        %1147 = vmatpush.msra.mxu0 0.0
        %1148 = vmatpush.msra.mxu0 0.0
        %1149 = vmatpush.msra.mxu0 0.0
        %1150 = vmatpush.msra.mxu0 0.0
        %1151 = vmatpush.msra.mxu0 %v1137
        %1152 = vmatpush.msra.mxu0 %v1136
        %1153 = vmatpush.msra.mxu0 %v1135
        %1154 = vmatpush.msra.mxu0 %v1134
        %1155 = vmatpush.msra.mxu0 %v1133
        %1156 = vmatpush.msra.mxu0 %v1132
        %1157 = vmatpush.msra.mxu0 %v1131
        %1158 = vmatpush.msra.mxu0 %v1130
        %1159 = vmatmul.f32.gmra.mxu0 %v1141
        %v1160 = vpop.f32.mrf.mxu0
        %v1161 = vadd.f32 %v1139, %v1160
        %1162 = vdwg.mxu0
        %v1163 = vadd.f32 %v1066, %v1161
        %v1164 = vld [vmem:[%s9] sm:$0x1]
        %v1165 = vld [vmem:[%s9 + $0x1] sm:$0x1]
        %v1166 = vsel %vm470, %v1163, 0.0
        %1167 = vadd.xlane.f32.xlu0 %v1166
        %v1168 = vpop.xlane.xlu0 %1167
        %v1169 = vmul.f32 %v1168, %v480
        %v1170 = vsub.f32 %v1163, %v1169
        %v1171 = vmul.f32 %v1170, %v1170
        %v1172 = vsel %vm470, %v1171, 0.0
        %1173 = vadd.xlane.f32.xlu0 %v1172
        %v1174 = vpop.xlane.xlu0 %1173
        %v1175 = vmul.f32 %v1174, %v480
        %v1176 = vadd.f32 %v1175, 1e-05
        %v1177 = vrsqrt.pop %v1176
        %v1178 = vmul.f32 %v1177, %v1176
        %v1179 = vmul.f32 %v1178, %v1177
        %v1180 = vmul.f32 0.5, %v1179
        %v1181 = vsub.f32 1.5, %v1180
        %v1182 = vmul.f32 %v1177, %v1181
        %vm1183 = vweird.f32 %v1176
        %vm1184 = vweird.f32 %v1177
        %vm1185 = vmor %vm1183, %vm1184
        %v1186 = vsel %vm1185, %v1177, %v1182
        %v1187 = vmul.f32 %v1170, %v1186
        %v1188 = vperm.slane %v1164, 0
        %v1189 = vmul.f32 %v1187, %v1188
        %v1190 = vperm.slane %v1165, 0
        %v1191 = vadd.f32 %v1189, %v1190
        %v1192 = vld [vmem:[%s462] sm:$0x1]
        %v1194 = vperm.slane %v1192, 0
        %v1196 = vadd.f32 %v1191, %v1194
        %v1197 = vlaneseq
        %v1198 = vshrl.u32 %v1197, 7
        %v1199 = vld [vmem:[%s12] sm:$0x1]
        %v1200 = vrot.slane %v1196, 7
        %vm1201 = vcmp.lt.s32.totalorder %v1198, 1
        %v1202 = vsel %vm1201, 1, 0
        %vm1203 = vcmp.eq.s32.totalorder %v1202, 1
        %v1204 = vsel %vm1203, 0.0, %v1200
        %v1205 = vld [vmem:[%s10] sm:$0xff]
        %v1206 = vld [vmem:[%s10 + $0x8] sm:$0xff]
        %v1207 = vld [vmem:[%s10 + $0x10] sm:$0xff]
        %v1208 = vld [vmem:[%s10 + $0x18] sm:$0xff]
        %v1210 = vsel %vm470, %v1204, 0
        %1212 = vmatpush.msra.mxu0 0.0
        %1213 = vmatpush.msra.mxu0 0.0
        %1214 = vmatpush.msra.mxu0 0.0
        %1215 = vmatpush.msra.mxu0 0.0
        %1216 = vmatpush.msra.mxu0 0.0
        %1217 = vmatpush.msra.mxu0 0.0
        %1218 = vmatpush.msra.mxu0 0.0
        %1219 = vmatpush.msra.mxu0 0.0
        %1220 = vmatpush.msra.mxu0 0.0
        %1221 = vmatpush.msra.mxu0 0.0
        %1222 = vmatpush.msra.mxu0 0.0
        %1223 = vmatpush.msra.mxu0 0.0
        %1224 = vmatpush.msra.mxu0 %v1208
        %1225 = vmatpush.msra.mxu0 %v1207
        %1226 = vmatpush.msra.mxu0 %v1206
        %1227 = vmatpush.msra.mxu0 %v1205
        %1228 = vmatmul.f32.gmra.mxu0 %v1210
        %v1229 = vpop.f32.mrf.mxu0
        %v1230 = vadd.f32 0.0, %v1229
        %1231 = vdwg.mxu0
        %v1232 = vperm.slane %v1199, 0
        %v1233 = vadd.f32 %v1232, %v1230
        %s1234 = scalar_lea.vmem %s10, 32
        %v1235 = vld [vmem:[%s1234] sm:$0xff]
        %v1236 = vld [vmem:[%s1234 + $0x8] sm:$0xff]
        %v1237 = vld [vmem:[%s1234 + $0x10] sm:$0xff]
        %v1238 = vld [vmem:[%s1234 + $0x18] sm:$0xff]
        %v1240 = vsel %vm470, %v1196, 0
        %1242 = vmatpush.msra.mxu0 0.0
        %1243 = vmatpush.msra.mxu0 0.0
        %1244 = vmatpush.msra.mxu0 0.0
        %1245 = vmatpush.msra.mxu0 0.0
        %1246 = vmatpush.msra.mxu0 0.0
        %1247 = vmatpush.msra.mxu0 0.0
        %1248 = vmatpush.msra.mxu0 0.0
        %1249 = vmatpush.msra.mxu0 0.0
        %1250 = vmatpush.msra.mxu0 0.0
        %1251 = vmatpush.msra.mxu0 0.0
        %1252 = vmatpush.msra.mxu0 0.0
        %1253 = vmatpush.msra.mxu0 0.0
        %1254 = vmatpush.msra.mxu0 %v1238
        %1255 = vmatpush.msra.mxu0 %v1237
        %1256 = vmatpush.msra.mxu0 %v1236
        %1257 = vmatpush.msra.mxu0 %v1235
        %1258 = vmatmul.f32.gmra.mxu0 %v1240
        %v1259 = vpop.f32.mrf.mxu0
        %v1260 = vadd.f32 0.0, %v1259
        %1261 = vdwg.mxu0
        %v1262 = vadd.f32 %v1233, %v1260
        %v1263 = vrot.slane %v1196, 1
        %vm1264 = vcmp.ge.s32.totalorder %v1198, 7
        %v1265 = vsel %vm1264, 1, 0
        %vm1266 = vcmp.eq.s32.totalorder %v1265, 1
        %v1267 = vsel %vm1266, 0.0, %v1263
        %s1268 = scalar_lea.vmem %s10, 64
        %v1269 = vld [vmem:[%s1268] sm:$0xff]
        %v1270 = vld [vmem:[%s1268 + $0x8] sm:$0xff]
        %v1271 = vld [vmem:[%s1268 + $0x10] sm:$0xff]
        %v1272 = vld [vmem:[%s1268 + $0x18] sm:$0xff]
        %v1274 = vsel %vm470, %v1267, 0
        %1276 = vmatpush.msra.mxu0 0.0
        %1277 = vmatpush.msra.mxu0 0.0
        %1278 = vmatpush.msra.mxu0 0.0
        %1279 = vmatpush.msra.mxu0 0.0
        %1280 = vmatpush.msra.mxu0 0.0
        %1281 = vmatpush.msra.mxu0 0.0
        %1282 = vmatpush.msra.mxu0 0.0
        %1283 = vmatpush.msra.mxu0 0.0
        %1284 = vmatpush.msra.mxu0 0.0
        %1285 = vmatpush.msra.mxu0 0.0
        %1286 = vmatpush.msra.mxu0 0.0
        %1287 = vmatpush.msra.mxu0 0.0
        %1288 = vmatpush.msra.mxu0 %v1272
        %1289 = vmatpush.msra.mxu0 %v1271
        %1290 = vmatpush.msra.mxu0 %v1270
        %1291 = vmatpush.msra.mxu0 %v1269
        %1292 = vmatmul.f32.gmra.mxu0 %v1274
        %v1293 = vpop.f32.mrf.mxu0
        %v1294 = vadd.f32 0.0, %v1293
        %1295 = vdwg.mxu0
        %v1296 = vadd.f32 %v1262, %v1294
        %v1297 = vmax.f32 %v1296, 0.0
        %v1298 = vld [vmem:[%s12 + $0x1] sm:$0x1]
        %v1299 = vld [vmem:[%s12 + $0x2] sm:$0x1]
        %v1300 = vsel %vm470, %v1297, 0.0
        %1301 = vadd.xlane.f32.xlu0 %v1300
        %v1302 = vpop.xlane.xlu0 %1301
        %v1303 = vmul.f32 %v1302, %v480
        %v1304 = vsub.f32 %v1297, %v1303
        %v1305 = vmul.f32 %v1304, %v1304
        %v1306 = vsel %vm470, %v1305, 0.0
        %1307 = vadd.xlane.f32.xlu0 %v1306
        %v1308 = vpop.xlane.xlu0 %1307
        %v1309 = vmul.f32 %v1308, %v480
        %v1310 = vadd.f32 %v1309, 1e-05
        %v1311 = vrsqrt.pop %v1310
        %v1312 = vmul.f32 %v1311, %v1310
        %v1313 = vmul.f32 %v1312, %v1311
        %v1314 = vmul.f32 0.5, %v1313
        %v1315 = vsub.f32 1.5, %v1314
        %v1316 = vmul.f32 %v1311, %v1315
        %vm1317 = vweird.f32 %v1310
        %vm1318 = vweird.f32 %v1311
        %vm1319 = vmor %vm1317, %vm1318
        %v1320 = vsel %vm1319, %v1311, %v1316
        %v1321 = vmul.f32 %v1304, %v1320
        %v1322 = vperm.slane %v1298, 0
        %v1323 = vmul.f32 %v1321, %v1322
        %v1324 = vperm.slane %v1299, 0
        %v1325 = vadd.f32 %v1323, %v1324
        %v1326 = vld [vmem:[%s12 + $0x3] sm:$0x1]
        %v1327 = vrot.slane %v1325, 7
        %v1328 = vsel %vm1203, 0.0, %v1327
        %v1329 = vld [vmem:[%s11] sm:$0xff]
        %v1330 = vld [vmem:[%s11 + $0x8] sm:$0xff]
        %v1331 = vld [vmem:[%s11 + $0x10] sm:$0xff]
        %v1332 = vld [vmem:[%s11 + $0x18] sm:$0xff]
        %v1334 = vsel %vm470, %v1328, 0
        %1336 = vmatpush.msra.mxu0 0.0
        %1337 = vmatpush.msra.mxu0 0.0
        %1338 = vmatpush.msra.mxu0 0.0
        %1339 = vmatpush.msra.mxu0 0.0
        %1340 = vmatpush.msra.mxu0 0.0
        %1341 = vmatpush.msra.mxu0 0.0
        %1342 = vmatpush.msra.mxu0 0.0
        %1343 = vmatpush.msra.mxu0 0.0
        %1344 = vmatpush.msra.mxu0 0.0
        %1345 = vmatpush.msra.mxu0 0.0
        %1346 = vmatpush.msra.mxu0 0.0
        %1347 = vmatpush.msra.mxu0 0.0
        %1348 = vmatpush.msra.mxu0 %v1332
        %1349 = vmatpush.msra.mxu0 %v1331
        %1350 = vmatpush.msra.mxu0 %v1330
        %1351 = vmatpush.msra.mxu0 %v1329
        %1352 = vmatmul.f32.gmra.mxu0 %v1334
        %v1353 = vpop.f32.mrf.mxu0
        %v1354 = vadd.f32 0.0, %v1353
        %1355 = vdwg.mxu0
        %v1356 = vperm.slane %v1326, 0
        %v1357 = vadd.f32 %v1356, %v1354
        %s1358 = scalar_lea.vmem %s11, 32
        %v1359 = vld [vmem:[%s1358] sm:$0xff]
        %v1360 = vld [vmem:[%s1358 + $0x8] sm:$0xff]
        %v1361 = vld [vmem:[%s1358 + $0x10] sm:$0xff]
        %v1362 = vld [vmem:[%s1358 + $0x18] sm:$0xff]
        %v1364 = vsel %vm470, %v1325, 0
        %1366 = vmatpush.msra.mxu0 0.0
        %1367 = vmatpush.msra.mxu0 0.0
        %1368 = vmatpush.msra.mxu0 0.0
        %1369 = vmatpush.msra.mxu0 0.0
        %1370 = vmatpush.msra.mxu0 0.0
        %1371 = vmatpush.msra.mxu0 0.0
        %1372 = vmatpush.msra.mxu0 0.0
        %1373 = vmatpush.msra.mxu0 0.0
        %1374 = vmatpush.msra.mxu0 0.0
        %1375 = vmatpush.msra.mxu0 0.0
        %1376 = vmatpush.msra.mxu0 0.0
        %1377 = vmatpush.msra.mxu0 0.0
        %1378 = vmatpush.msra.mxu0 %v1362
        %1379 = vmatpush.msra.mxu0 %v1361
        %1380 = vmatpush.msra.mxu0 %v1360
        %1381 = vmatpush.msra.mxu0 %v1359
        %1382 = vmatmul.f32.gmra.mxu0 %v1364
        %v1383 = vpop.f32.mrf.mxu0
        %v1384 = vadd.f32 0.0, %v1383
        %1385 = vdwg.mxu0
        %v1386 = vadd.f32 %v1357, %v1384
        %v1387 = vrot.slane %v1325, 1
        %v1388 = vsel %vm1266, 0.0, %v1387
        %s1389 = scalar_lea.vmem %s11, 64
        %v1390 = vld [vmem:[%s1389] sm:$0xff]
        %v1391 = vld [vmem:[%s1389 + $0x8] sm:$0xff]
        %v1392 = vld [vmem:[%s1389 + $0x10] sm:$0xff]
        %v1393 = vld [vmem:[%s1389 + $0x18] sm:$0xff]
        %v1395 = vsel %vm470, %v1388, 0
        %1397 = vmatpush.msra.mxu0 0.0
        %1398 = vmatpush.msra.mxu0 0.0
        %1399 = vmatpush.msra.mxu0 0.0
        %1400 = vmatpush.msra.mxu0 0.0
        %1401 = vmatpush.msra.mxu0 0.0
        %1402 = vmatpush.msra.mxu0 0.0
        %1403 = vmatpush.msra.mxu0 0.0
        %1404 = vmatpush.msra.mxu0 0.0
        %1405 = vmatpush.msra.mxu0 0.0
        %1406 = vmatpush.msra.mxu0 0.0
        %1407 = vmatpush.msra.mxu0 0.0
        %1408 = vmatpush.msra.mxu0 0.0
        %1409 = vmatpush.msra.mxu0 %v1393
        %1410 = vmatpush.msra.mxu0 %v1392
        %1411 = vmatpush.msra.mxu0 %v1391
        %1412 = vmatpush.msra.mxu0 %v1390
        %1413 = vmatmul.f32.gmra.mxu0 %v1395
        %v1414 = vpop.f32.mrf.mxu0
        %v1415 = vadd.f32 0.0, %v1414
        %1416 = vdwg.mxu0
        %v1417 = vadd.f32 %v1386, %v1415
        %v1418 = vmax.f32 %v1417, 0.0
        %v1419 = vld [vmem:[%s12 + $0x4] sm:$0x1]
        %v1420 = vld [vmem:[%s12 + $0x5] sm:$0x1]
        %v1421 = vsel %vm470, %v1418, 0.0
        %1422 = vadd.xlane.f32.xlu0 %v1421
        %v1423 = vpop.xlane.xlu0 %1422
        %v1424 = vmul.f32 %v1423, %v480
        %v1425 = vsub.f32 %v1418, %v1424
        %v1426 = vmul.f32 %v1425, %v1425
        %v1427 = vsel %vm470, %v1426, 0.0
        %1428 = vadd.xlane.f32.xlu0 %v1427
        %v1429 = vpop.xlane.xlu0 %1428
        %v1430 = vmul.f32 %v1429, %v480
        %v1431 = vadd.f32 %v1430, 1e-05
        %v1432 = vrsqrt.pop %v1431
        %v1433 = vmul.f32 %v1432, %v1431
        %v1434 = vmul.f32 %v1433, %v1432
        %v1435 = vmul.f32 0.5, %v1434
        %v1436 = vsub.f32 1.5, %v1435
        %v1437 = vmul.f32 %v1432, %v1436
        %vm1438 = vweird.f32 %v1431
        %vm1439 = vweird.f32 %v1432
        %vm1440 = vmor %vm1438, %vm1439
        %v1441 = vsel %vm1440, %v1432, %v1437
        %v1442 = vmul.f32 %v1425, %v1441
        %v1443 = vperm.slane %v1419, 0
        %v1444 = vmul.f32 %v1442, %v1443
        %v1445 = vperm.slane %v1420, 0
        %v1446 = vadd.f32 %v1444, %v1445
        %v1447 = vld [vmem:[%s12 + $0x6] sm:$0x1]
        %v1448 = vld [vmem:[%s12 + $0x7] sm:$0x1]
        %1450 = vset.pattern.permute.xlu0 0
        %1451 = vperm.xlu0 %1450, %v1448
        %v1452 = vpop.permute.xlu0 %1451
        %v1455 = vsel %vm470, %v1447, 0
        %v1458 = vsel %vm470, %v1446, 0
        %1460 = vmatpush.xpose.msra.mxu0 0.0
        %1461 = vmatpush.xpose.msra.mxu0 0.0
        %1462 = vmatpush.xpose.msra.mxu0 0.0
        %1463 = vmatpush.xpose.msra.mxu0 0.0
        %1464 = vmatpush.xpose.msra.mxu0 0.0
        %1465 = vmatpush.xpose.msra.mxu0 0.0
        %1466 = vmatpush.xpose.msra.mxu0 0.0
        %1467 = vmatpush.xpose.msra.mxu0 0.0
        %1468 = vmatpush.xpose.msra.mxu0 0.0
        %1469 = vmatpush.xpose.msra.mxu0 0.0
        %1470 = vmatpush.xpose.msra.mxu0 0.0
        %1471 = vmatpush.xpose.msra.mxu0 0.0
        %1472 = vmatpush.xpose.msra.mxu0 0.0
        %1473 = vmatpush.xpose.msra.mxu0 0.0
        %1474 = vmatpush.xpose.msra.mxu0 0.0
        %1475 = vmatpush.xpose.msra.mxu0 %v1458
        %1476 = vmatmul.f32.gmra.mxu0 %v1455
        %v1477 = vpop.f32.mrf.mxu0
        %v1478 = vadd.f32 %v1452, %v1477
        %1479 = vdwg.mxu0
        %vm1480 = vcmask 57344
        %1481 = vst.msk [vmem:[%s466] sm:$0x1] %vm1480, %v1478
        %s1482 = scalar_lea.vmem %s12, 8
        %v1483 = vld [vmem:[%s1482] sm:$0x1]
        %s1484 = scalar_lea.vmem %s10, 96
        %v1485 = vld [vmem:[%s1484] sm:$0xff]
        %v1486 = vld [vmem:[%s1484 + $0x8] sm:$0xff]
        %v1487 = vld [vmem:[%s1484 + $0x10] sm:$0xff]
        %v1488 = vld [vmem:[%s1484 + $0x18] sm:$0xff]
        %1489 = vmatpush.msra.mxu0 0.0
        %1490 = vmatpush.msra.mxu0 0.0
        %1491 = vmatpush.msra.mxu0 0.0
        %1492 = vmatpush.msra.mxu0 0.0
        %1493 = vmatpush.msra.mxu0 0.0
        %1494 = vmatpush.msra.mxu0 0.0
        %1495 = vmatpush.msra.mxu0 0.0
        %1496 = vmatpush.msra.mxu0 0.0
        %1497 = vmatpush.msra.mxu0 0.0
        %1498 = vmatpush.msra.mxu0 0.0
        %1499 = vmatpush.msra.mxu0 0.0
        %1500 = vmatpush.msra.mxu0 0.0
        %1501 = vmatpush.msra.mxu0 %v1488
        %1502 = vmatpush.msra.mxu0 %v1487
        %1503 = vmatpush.msra.mxu0 %v1486
        %1504 = vmatpush.msra.mxu0 %v1485
        %1505 = vmatmul.f32.gmra.mxu0 %v1210
        %v1506 = vpop.f32.mrf.mxu0
        %v1507 = vadd.f32 0.0, %v1506
        %1508 = vdwg.mxu0
        %v1509 = vperm.slane %v1483, 0
        %v1510 = vadd.f32 %v1509, %v1507
        %s1511 = scalar_lea.vmem %s10, 128
        %v1512 = vld [vmem:[%s1511] sm:$0xff]
        %v1513 = vld [vmem:[%s1511 + $0x8] sm:$0xff]
        %v1514 = vld [vmem:[%s1511 + $0x10] sm:$0xff]
        %v1515 = vld [vmem:[%s1511 + $0x18] sm:$0xff]
        %1516 = vmatpush.msra.mxu0 0.0
        %1517 = vmatpush.msra.mxu0 0.0
        %1518 = vmatpush.msra.mxu0 0.0
        %1519 = vmatpush.msra.mxu0 0.0
        %1520 = vmatpush.msra.mxu0 0.0
        %1521 = vmatpush.msra.mxu0 0.0
        %1522 = vmatpush.msra.mxu0 0.0
        %1523 = vmatpush.msra.mxu0 0.0
        %1524 = vmatpush.msra.mxu0 0.0
        %1525 = vmatpush.msra.mxu0 0.0
        %1526 = vmatpush.msra.mxu0 0.0
        %1527 = vmatpush.msra.mxu0 0.0
        %1528 = vmatpush.msra.mxu0 %v1515
        %1529 = vmatpush.msra.mxu0 %v1514
        %1530 = vmatpush.msra.mxu0 %v1513
        %1531 = vmatpush.msra.mxu0 %v1512
        %1532 = vmatmul.f32.gmra.mxu0 %v1240
        %v1533 = vpop.f32.mrf.mxu0
        %v1534 = vadd.f32 0.0, %v1533
        %1535 = vdwg.mxu0
        %v1536 = vadd.f32 %v1510, %v1534
        %s1537 = scalar_lea.vmem %s10, 160
        %v1538 = vld [vmem:[%s1537] sm:$0xff]
        %v1539 = vld [vmem:[%s1537 + $0x8] sm:$0xff]
        %v1540 = vld [vmem:[%s1537 + $0x10] sm:$0xff]
        %v1541 = vld [vmem:[%s1537 + $0x18] sm:$0xff]
        %1542 = vmatpush.msra.mxu0 0.0
        %1543 = vmatpush.msra.mxu0 0.0
        %1544 = vmatpush.msra.mxu0 0.0
        %1545 = vmatpush.msra.mxu0 0.0
        %1546 = vmatpush.msra.mxu0 0.0
        %1547 = vmatpush.msra.mxu0 0.0
        %1548 = vmatpush.msra.mxu0 0.0
        %1549 = vmatpush.msra.mxu0 0.0
        %1550 = vmatpush.msra.mxu0 0.0
        %1551 = vmatpush.msra.mxu0 0.0
        %1552 = vmatpush.msra.mxu0 0.0
        %1553 = vmatpush.msra.mxu0 0.0
        %1554 = vmatpush.msra.mxu0 %v1541
        %1555 = vmatpush.msra.mxu0 %v1540
        %1556 = vmatpush.msra.mxu0 %v1539
        %1557 = vmatpush.msra.mxu0 %v1538
        %1558 = vmatmul.f32.gmra.mxu0 %v1274
        %v1559 = vpop.f32.mrf.mxu0
        %v1560 = vadd.f32 0.0, %v1559
        %1561 = vdwg.mxu0
        %v1562 = vadd.f32 %v1536, %v1560
        %v1563 = vmax.f32 %v1562, 0.0
        %v1564 = vld [vmem:[%s1482 + $0x1] sm:$0x1]
        %v1565 = vld [vmem:[%s1482 + $0x2] sm:$0x1]
        %v1566 = vsel %vm470, %v1563, 0.0
        %1567 = vadd.xlane.f32.xlu0 %v1566
        %v1568 = vpop.xlane.xlu0 %1567
        %v1569 = vmul.f32 %v1568, %v480
        %v1570 = vsub.f32 %v1563, %v1569
        %v1571 = vmul.f32 %v1570, %v1570
        %v1572 = vsel %vm470, %v1571, 0.0
        %1573 = vadd.xlane.f32.xlu0 %v1572
        %v1574 = vpop.xlane.xlu0 %1573
        %v1575 = vmul.f32 %v1574, %v480
        %v1576 = vadd.f32 %v1575, 1e-05
        %v1577 = vrsqrt.pop %v1576
        %v1578 = vmul.f32 %v1577, %v1576
        %v1579 = vmul.f32 %v1578, %v1577
        %v1580 = vmul.f32 0.5, %v1579
        %v1581 = vsub.f32 1.5, %v1580
        %v1582 = vmul.f32 %v1577, %v1581
        %vm1583 = vweird.f32 %v1576
        %vm1584 = vweird.f32 %v1577
        %vm1585 = vmor %vm1583, %vm1584
        %v1586 = vsel %vm1585, %v1577, %v1582
        %v1587 = vmul.f32 %v1570, %v1586
        %v1588 = vperm.slane %v1564, 0
        %v1589 = vmul.f32 %v1587, %v1588
        %v1590 = vperm.slane %v1565, 0
        %v1591 = vadd.f32 %v1589, %v1590
        %v1592 = vld [vmem:[%s1482 + $0x3] sm:$0x1]
        %v1593 = vrot.slane %v1591, 7
        %v1594 = vsel %vm1203, 0.0, %v1593
        %s1595 = scalar_lea.vmem %s11, 96
        %v1596 = vld [vmem:[%s1595] sm:$0xff]
        %v1597 = vld [vmem:[%s1595 + $0x8] sm:$0xff]
        %v1598 = vld [vmem:[%s1595 + $0x10] sm:$0xff]
        %v1599 = vld [vmem:[%s1595 + $0x18] sm:$0xff]
        %v1601 = vsel %vm470, %v1594, 0
        %1603 = vmatpush.msra.mxu0 0.0
        %1604 = vmatpush.msra.mxu0 0.0
        %1605 = vmatpush.msra.mxu0 0.0
        %1606 = vmatpush.msra.mxu0 0.0
        %1607 = vmatpush.msra.mxu0 0.0
        %1608 = vmatpush.msra.mxu0 0.0
        %1609 = vmatpush.msra.mxu0 0.0
        %1610 = vmatpush.msra.mxu0 0.0
        %1611 = vmatpush.msra.mxu0 0.0
        %1612 = vmatpush.msra.mxu0 0.0
        %1613 = vmatpush.msra.mxu0 0.0
        %1614 = vmatpush.msra.mxu0 0.0
        %1615 = vmatpush.msra.mxu0 %v1599
        %1616 = vmatpush.msra.mxu0 %v1598
        %1617 = vmatpush.msra.mxu0 %v1597
        %1618 = vmatpush.msra.mxu0 %v1596
        %1619 = vmatmul.f32.gmra.mxu0 %v1601
        %v1620 = vpop.f32.mrf.mxu0
        %v1621 = vadd.f32 0.0, %v1620
        %1622 = vdwg.mxu0
        %v1623 = vperm.slane %v1592, 0
        %v1624 = vadd.f32 %v1623, %v1621
        %s1625 = scalar_lea.vmem %s11, 128
        %v1626 = vld [vmem:[%s1625] sm:$0xff]
        %v1627 = vld [vmem:[%s1625 + $0x8] sm:$0xff]
        %v1628 = vld [vmem:[%s1625 + $0x10] sm:$0xff]
        %v1629 = vld [vmem:[%s1625 + $0x18] sm:$0xff]
        %v1631 = vsel %vm470, %v1591, 0
        %1633 = vmatpush.msra.mxu0 0.0
        %1634 = vmatpush.msra.mxu0 0.0
        %1635 = vmatpush.msra.mxu0 0.0
        %1636 = vmatpush.msra.mxu0 0.0
        %1637 = vmatpush.msra.mxu0 0.0
        %1638 = vmatpush.msra.mxu0 0.0
        %1639 = vmatpush.msra.mxu0 0.0
        %1640 = vmatpush.msra.mxu0 0.0
        %1641 = vmatpush.msra.mxu0 0.0
        %1642 = vmatpush.msra.mxu0 0.0
        %1643 = vmatpush.msra.mxu0 0.0
        %1644 = vmatpush.msra.mxu0 0.0
        %1645 = vmatpush.msra.mxu0 %v1629
        %1646 = vmatpush.msra.mxu0 %v1628
        %1647 = vmatpush.msra.mxu0 %v1627
        %1648 = vmatpush.msra.mxu0 %v1626
        %1649 = vmatmul.f32.gmra.mxu0 %v1631
        %v1650 = vpop.f32.mrf.mxu0
        %v1651 = vadd.f32 0.0, %v1650
        %1652 = vdwg.mxu0
        %v1653 = vadd.f32 %v1624, %v1651
        %v1654 = vrot.slane %v1591, 1
        %v1655 = vsel %vm1266, 0.0, %v1654
        %s1656 = scalar_lea.vmem %s11, 160
        %v1657 = vld [vmem:[%s1656] sm:$0xff]
        %v1658 = vld [vmem:[%s1656 + $0x8] sm:$0xff]
        %v1659 = vld [vmem:[%s1656 + $0x10] sm:$0xff]
        %v1660 = vld [vmem:[%s1656 + $0x18] sm:$0xff]
        %v1662 = vsel %vm470, %v1655, 0
        %1664 = vmatpush.msra.mxu0 0.0
        %1665 = vmatpush.msra.mxu0 0.0
        %1666 = vmatpush.msra.mxu0 0.0
        %1667 = vmatpush.msra.mxu0 0.0
        %1668 = vmatpush.msra.mxu0 0.0
        %1669 = vmatpush.msra.mxu0 0.0
        %1670 = vmatpush.msra.mxu0 0.0
        %1671 = vmatpush.msra.mxu0 0.0
        %1672 = vmatpush.msra.mxu0 0.0
        %1673 = vmatpush.msra.mxu0 0.0
        %1674 = vmatpush.msra.mxu0 0.0
        %1675 = vmatpush.msra.mxu0 0.0
        %1676 = vmatpush.msra.mxu0 %v1660
        %1677 = vmatpush.msra.mxu0 %v1659
        %1678 = vmatpush.msra.mxu0 %v1658
        %1679 = vmatpush.msra.mxu0 %v1657
        %1680 = vmatmul.f32.gmra.mxu0 %v1662
        %v1681 = vpop.f32.mrf.mxu0
        %v1682 = vadd.f32 0.0, %v1681
        %1683 = vdwg.mxu0
        %v1684 = vadd.f32 %v1653, %v1682
        %v1685 = vmax.f32 %v1684, 0.0
        %v1686 = vld [vmem:[%s1482 + $0x4] sm:$0x1]
        %v1687 = vld [vmem:[%s1482 + $0x5] sm:$0x1]
        %v1688 = vsel %vm470, %v1685, 0.0
        %1689 = vadd.xlane.f32.xlu0 %v1688
        %v1690 = vpop.xlane.xlu0 %1689
        %v1691 = vmul.f32 %v1690, %v480
        %v1692 = vsub.f32 %v1685, %v1691
        %v1693 = vmul.f32 %v1692, %v1692
        %v1694 = vsel %vm470, %v1693, 0.0
        %1695 = vadd.xlane.f32.xlu0 %v1694
        %v1696 = vpop.xlane.xlu0 %1695
        %v1697 = vmul.f32 %v1696, %v480
        %v1698 = vadd.f32 %v1697, 1e-05
        %v1699 = vrsqrt.pop %v1698
        %v1700 = vmul.f32 %v1699, %v1698
        %v1701 = vmul.f32 %v1700, %v1699
        %v1702 = vmul.f32 0.5, %v1701
        %v1703 = vsub.f32 1.5, %v1702
        %v1704 = vmul.f32 %v1699, %v1703
        %vm1705 = vweird.f32 %v1698
        %vm1706 = vweird.f32 %v1699
        %vm1707 = vmor %vm1705, %vm1706
        %v1708 = vsel %vm1707, %v1699, %v1704
        %v1709 = vmul.f32 %v1692, %v1708
        %v1710 = vperm.slane %v1686, 0
        %v1711 = vmul.f32 %v1709, %v1710
        %v1712 = vperm.slane %v1687, 0
        %v1713 = vadd.f32 %v1711, %v1712
        %v1714 = vld [vmem:[%s1482 + $0x6] sm:$0x1]
        %v1715 = vld [vmem:[%s1482 + $0x7] sm:$0x1]
        %1717 = vset.pattern.permute.xlu0 0
        %1718 = vperm.xlu0 %1717, %v1715
        %v1719 = vpop.permute.xlu0 %1718
        %v1722 = vsel %vm470, %v1714, 0
        %v1725 = vsel %vm470, %v1713, 0
        %1727 = vmatpush.xpose.msra.mxu0 0.0
        %1728 = vmatpush.xpose.msra.mxu0 0.0
        %1729 = vmatpush.xpose.msra.mxu0 0.0
        %1730 = vmatpush.xpose.msra.mxu0 0.0
        %1731 = vmatpush.xpose.msra.mxu0 0.0
        %1732 = vmatpush.xpose.msra.mxu0 0.0
        %1733 = vmatpush.xpose.msra.mxu0 0.0
        %1734 = vmatpush.xpose.msra.mxu0 0.0
        %1735 = vmatpush.xpose.msra.mxu0 0.0
        %1736 = vmatpush.xpose.msra.mxu0 0.0
        %1737 = vmatpush.xpose.msra.mxu0 0.0
        %1738 = vmatpush.xpose.msra.mxu0 0.0
        %1739 = vmatpush.xpose.msra.mxu0 0.0
        %1740 = vmatpush.xpose.msra.mxu0 0.0
        %1741 = vmatpush.xpose.msra.mxu0 0.0
        %1742 = vmatpush.xpose.msra.mxu0 %v1725
        %1743 = vmatmul.f32.gmra.mxu0 %v1722
        %v1744 = vpop.f32.mrf.mxu0
        %v1745 = vadd.f32 %v1719, %v1744
        %1746 = vdwg.mxu0
        %1747 = vst.msk [vmem:[%s466 + $0x1] sm:$0x1] %vm1480, %v1745
        %p1748 = scmp.lt.s32.totalorder %s25, 1
        %s1749 = scalar_select %p1748, %s25, 1
        %s1750 = smul.addr %s1749, 2
        %s1751 = scalar_lea.vmem %s13, %s1750
        // Predicated region
        $region77: #{pitch_and_duration_predictor.1} parent=71 // pred_check
          %p1752 = pneg %p326
        $region78: #{pitch_and_duration_predictor.1} parent=71 // pred_check_branch
          %1754 = sbr.rel (%p1752) target = $region80
        $region79: #{pitch_and_duration_predictor.1} parent=71 // pred_region
          _
        $region80: #{pitch_and_duration_predictor.1} parent=71 // pred_fallthru
          _
      $region72: #{pitch_and_duration_predictor.1} parent=5 // pred_fallthru
        _
      %p1755 = scmp.le.s32.totalorder 2, %s20
      // Predicated region
      $region81: #{pitch_and_duration_predictor.1} parent=5 // pred_check
        %p1756 = pneg %p1755
      $region82: #{pitch_and_duration_predictor.1} parent=5 // pred_check_branch
        %1758 = sbr.rel (%p1756) target = $region84
      $region83: #{pitch_and_duration_predictor.1} parent=5 // pred_region
        %s1759 = ssub.s32 %s20, 2
        // Predicated region
        $region85: #{pitch_and_duration_predictor.1} parent=83 // pred_check
          %p1760 = pneg %p332
        $region86: #{pitch_and_duration_predictor.1} parent=83 // pred_check_branch
          %1762 = sbr.rel (%p1760) target = $region88
        $region87: #{pitch_and_duration_predictor.1} parent=83 // pred_region
          %p1763 = scmp.lt.s32.totalorder %s26, 1
          %s1764 = scalar_select %p1763, %s26, 1
          %s1765 = smul.addr %s1764, 2
          %s1766 = scalar_lea.vmem %s13, %s1765
        $region88: #{pitch_and_duration_predictor.1} parent=83 // pred_fallthru
          _
      $region84: #{pitch_and_duration_predictor.1} parent=5 // pred_fallthru
        _
    $region6: #{pitch_and_duration_predictor.1} parent=1 // loop_footer
      %s24 = sadd.s32 1, %s20
    $region7: #{pitch_and_duration_predictor.1} parent=1 // loop_footer_branch
      %19 = sbr.rel target = $region3
    $region8: #{pitch_and_duration_predictor.1} parent=1 // loop_exit
      _
    %1767 = vsyncpa [#allocation3], 1
    %s1768 = scalar_lea.sflag [#allocation3], 1
    %1769 = vsyncpa %s1768, 1

</llo_original>
